<compile_context>
chip_gen: v5e
topology: v5e:2x2
jax: 0.10.0
libtpu: 0.0.40
codegen_flags: <defaults>
</compile_context>

<pallas_src>
import functools

import jax
import jax.numpy as jnp
from jax.experimental import pallas as pl
from jax.experimental.pallas import tpu as pltpu

LEAKY_SLOPE = 0.2
GIN_EPS = 0.0      # torch_geometric GINConv default eps
BN_EPS = 1e-5

HP = 128           # hidden dim zero-padded to a full lane width
LP = 128           # latent dim zero-padded to a full lane width
GP = 8             # number of graphs zero-padded to a full sublane width

_VMEM = pl.BlockSpec(memory_space=pltpu.MemorySpace.VMEM)
_CPARAMS_SMALL = pltpu.CompilerParams(vmem_limit_bytes=32 * 1024 * 1024)


def _leaky(z):
    # max/min form: one select fewer than jnp.where (matters on v5e VALU).
    return jnp.maximum(z, 0.0) + LEAKY_SLOPE * jnp.minimum(z, 0.0)


def _round_up(x, m):
    return ((x + m - 1) // m) * m


# ----------------------------------------------------------------------------
# Fused small-graph kernel: all conv layers + pool + BN + fc in one launch.
# ----------------------------------------------------------------------------
def fused_gin_kernel(adj_ref, x_ref, w1s_ref, b1s_ref, s1s_ref, t1s_ref,
                     w2s_ref, b2s_ref, pmat_ref, bns_ref, bnt_ref,
                     wf_ref, bf_ref, out_ref):
    adj = adj_ref[...]                                   # (Np, Np) bf16 = A + (1+eps)I
    h = x_ref[...]                                       # (Np, HP) bf16
    n_layers = w1s_ref.shape[0]
    for l in range(n_layers):                            # static unroll over layers
        # Apply W1 before aggregation (Linear is affine -> identical result),
        # so the adjacency matmul is always 128 lanes wide.
        y = jnp.dot(h, w1s_ref[l], preferred_element_type=jnp.float32)
        z = jnp.dot(adj, y.astype(jnp.bfloat16),
                    preferred_element_type=jnp.float32) + b1s_ref[l]
        z = _leaky(z)
        z = z * s1s_ref[l] + t1s_ref[l]                  # BatchNorm1d (eval, folded)
        z = jnp.dot(z.astype(jnp.bfloat16), w2s_ref[l],
                    preferred_element_type=jnp.float32) + b2s_ref[l]
        h = _leaky(z).astype(jnp.bfloat16)               # bf16 inter-layer activations
        # dropout: identity in eval mode
    # global_add_pool -> BatchNorm1d (eval, folded) -> Linear
    pooled = jnp.dot(pmat_ref[...], h, preferred_element_type=jnp.float32)
    pooled = pooled * bns_ref[...] + bnt_ref[...]
    out_ref[...] = jnp.dot(pooled.astype(jnp.bfloat16), wf_ref[...],
                           preferred_element_type=jnp.float32) + bf_ref[...]


def gin_forward_fused(adj_p, x_p, pmat_p, params):
    gp, lp = pmat_p.shape[0], params["fc_w"].shape[1]
    return pl.pallas_call(
        fused_gin_kernel,
        out_shape=jax.ShapeDtypeStruct((gp, lp), jnp.float32),
        in_specs=[_VMEM] * 13,
        out_specs=_VMEM,
        compiler_params=_CPARAMS_SMALL,
    )(adj_p, x_p, params["w1s"], params["b1s"], params["s1s"], params["t1s"],
      params["w2s"], params["b2s"], pmat_p, params["bn_s"], params["bn_t"],
      params["fc_w"], params["fc_b"])


def gin_forward(adj_p, x_p, pmat_p, params, *, num_graphs, latent_dim):
    """Mirrors GIN.forward: returns (None, out)."""
    out_p = gin_forward_fused(adj_p, x_p, pmat_p, params)
    return (None, out_p[:num_graphs, :latent_dim])


# ----------------------------------------------------------------------------
# Tiled / gridded GINConv layer (large-graph path).
#   adjacency: int8 tiles (tm, tk), upcast to bf16 at the MXU feed
#   h:         full-extent, VMEM-resident across the row axis, sliced in-kernel
#   reduction over k with f32 accumulator; MLP finalize on the last k step.
# ----------------------------------------------------------------------------
def gin_conv_tiled_kernel(adj_ref, h_ref, w1_ref, b1_ref, s1_ref, t1_ref,
                          w2_ref, b2_ref, out_ref, acc_ref, *, tk):
    k = pl.program_id(1)

    @pl.when(k == 0)
    def _():
        acc_ref[...] = jnp.zeros_like(acc_ref)

    # int8 adjacency tile -> bf16 MXU feed against the VMEM-resident h slice.
    adj = adj_ref[...].astype(jnp.bfloat16)
    off = pl.multiple_of(k * tk, tk)
    hk = h_ref[pl.ds(off, tk), :]
    acc_ref[...] += jnp.dot(adj, hk, preferred_element_type=jnp.float32)

    @pl.when(k == pl.num_programs(1) - 1)
    def _():
        z = jnp.dot(acc_ref[...].astype(jnp.bfloat16), w1_ref[...],
                    preferred_element_type=jnp.float32) + b1_ref[...]
        z = _leaky(z)
        z = z * s1_ref[...] + t1_ref[...]                # BatchNorm1d (eval, folded)
        z = jnp.dot(z.astype(jnp.bfloat16), w2_ref[...],
                    preferred_element_type=jnp.float32) + b2_ref[...]
        out_ref[...] = _leaky(z).astype(out_ref.dtype)


def gin_conv_tiled(adj_i8, h, w1, b1, s1, t1, w2, b2, *, tm=256, tk=512):
    n_rows, n_cols = adj_i8.shape
    f = h.shape[1]
    hp = w2.shape[1]

    # Pad remainders instead of silently truncating (pl.cdiv grid below).
    nr = _round_up(n_rows, tm)
    nc = _round_up(n_cols, tk)
    if (nr, nc) != adj_i8.shape:
        adj_i8 = jnp.pad(adj_i8, ((0, nr - n_rows), (0, nc - n_cols)))
    if h.shape[0] != nc:
        h = jnp.pad(h, ((0, nc - h.shape[0]), (0, 0)))

    grid = (pl.cdiv(nr, tm), pl.cdiv(nc, tk))

    # Explicit VMEM budget (v7x has only 64 MiB physical / 32 MiB scoped default).
    vmem_bytes = (2 * nc * f * 2          # resident h (+ pipeline copy)
                  + 2 * tm * tk           # int8 adjacency double buffer
                  + tm * f * 4            # f32 accumulator scratch
                  + 2 * tm * hp * 2       # bf16 output double buffer
                  + 4 * hp * hp * 2       # W1/W2 bf16, double-buffered
                  + (4 << 20))            # small operands + headroom
    vmem_limit = int(max(32 << 20, min(vmem_bytes, 60 << 20)))

    out = pl.pallas_call(
        functools.partial(gin_conv_tiled_kernel, tk=tk),
        out_shape=jax.ShapeDtypeStruct((nr, hp), jnp.bfloat16),
        grid_spec=pltpu.PrefetchScalarGridSpec(
            num_scalar_prefetch=0,
            grid=grid,
            in_specs=[
                pl.BlockSpec((tm, tk), lambda i, k: (i, k)),   # adjacency tile (int8)
                pl.BlockSpec((nc, f), lambda i, k: (0, 0)),    # h: VMEM-resident
                pl.BlockSpec((f, hp), lambda i, k: (0, 0)),    # W1 (bf16)
                pl.BlockSpec((1, hp), lambda i, k: (0, 0)),    # b1
                pl.BlockSpec((1, hp), lambda i, k: (0, 0)),    # bn scale
                pl.BlockSpec((1, hp), lambda i, k: (0, 0)),    # bn shift
                pl.BlockSpec((hp, hp), lambda i, k: (0, 0)),   # W2 (bf16)
                pl.BlockSpec((1, hp), lambda i, k: (0, 0)),    # b2
            ],
            out_specs=pl.BlockSpec((tm, hp), lambda i, k: (i, 0)),
            scratch_shapes=[pltpu.VMEM((tm, f), jnp.float32)],
        ),
        compiler_params=pltpu.CompilerParams(
            dimension_semantics=("parallel", "arbitrary"),
            vmem_limit_bytes=vmem_limit,
        ),
    )(adj_i8, h, w1, b1, s1, t1, w2, b2)
    return out[:n_rows] if nr != n_rows else out


def pool_head_kernel(pmat_ref, h_ref, s_ref, t_ref, wf_ref, bf_ref, out_ref):
    """global_add_pool (as P @ H) -> BatchNorm1d (eval, folded) -> Linear."""
    pooled = jnp.dot(pmat_ref[...], h_ref[...], preferred_element_type=jnp.float32)
    pooled = pooled * s_ref[...] + t_ref[...]
    out_ref[...] = jnp.dot(pooled.astype(jnp.bfloat16), wf_ref[...],
                           preferred_element_type=jnp.float32) + bf_ref[...]


def pool_head(pmat_p, h, bn_s, bn_t, fc_w, fc_b):
    gp, lp = pmat_p.shape[0], fc_w.shape[1]
    return pl.pallas_call(
        pool_head_kernel,
        out_shape=jax.ShapeDtypeStruct((gp, lp), jnp.float32),
        in_specs=[_VMEM] * 6,
        out_specs=_VMEM,
        compiler_params=_CPARAMS_SMALL,
    )(pmat_p, h, bn_s, bn_t, fc_w, fc_b)


# ----------------------------------------------------------------------------
# Deterministic parameters (torch-style init), zero-padded to lane-dense shapes
# ----------------------------------------------------------------------------
def pad2(a, rows, cols):
    return jnp.pad(a, ((0, rows - a.shape[0]), (0, cols - a.shape[1])))


def pad_row(v, cols):
    return jnp.pad(v, (0, cols - v.shape[0]))[None, :]


def init_linear(key, fan_in, fan_out):
    kw, kb = jax.random.split(key)
    bound = 1.0 / float(fan_in) ** 0.5
    w = jax.random.uniform(kw, (fan_in, fan_out), jnp.float32, -bound, bound)
    b = jax.random.uniform(kb, (fan_out,), jnp.float32, -bound, bound)
    return w, b


def folded_bn(dim):
    # gamma=1, beta=0, running_mean=0, running_var=1 (fresh BatchNorm1d, eval)
    scale = jnp.full((dim,), (1.0 + BN_EPS) ** -0.5, jnp.float32)
    shift = jnp.zeros((dim,), jnp.float32)
    return scale, shift


def init_params(key, input_dim, hidden_dim, latent_dim, n_layers):
    w1s, b1s, s1s, t1s, w2s, b2s = [], [], [], [], [], []
    in_dim = input_dim
    for _ in range(n_layers):
        key, k1, k2 = jax.random.split(key, 3)
        w1, b1 = init_linear(k1, in_dim, hidden_dim)
        s1, t1 = folded_bn(hidden_dim)
        w2, b2 = init_linear(k2, hidden_dim, hidden_dim)
        w1s.append(pad2(w1, HP, HP).astype(jnp.bfloat16))
        b1s.append(pad_row(b1, HP))
        s1s.append(pad_row(s1, HP))
        t1s.append(pad_row(t1, HP))
        w2s.append(pad2(w2, HP, HP).astype(jnp.bfloat16))
        b2s.append(pad_row(b2, HP))
        in_dim = hidden_dim
    key, kf = jax.random.split(key)
    bn_s, bn_t = folded_bn(hidden_dim)
    fc_w, fc_b = init_linear(kf, hidden_dim, latent_dim)
    return dict(
        w1s=jnp.stack(w1s), b1s=jnp.stack(b1s), s1s=jnp.stack(s1s),
        t1s=jnp.stack(t1s), w2s=jnp.stack(w2s), b2s=jnp.stack(b2s),
        bn_s=pad_row(bn_s, HP), bn_t=pad_row(bn_t, HP),
        fc_w=pad2(fc_w, HP, LP).astype(jnp.bfloat16), fc_b=pad_row(fc_b, LP),
    )


# ----------------------------------------------------------------------------
# Pure-JAX mirror of the fused kernel (same cast points) for validation
# ----------------------------------------------------------------------------
def reference_forward(adj_p, x_p, pmat_p, p):
    h = x_p
    for l in range(p["w1s"].shape[0]):
        y = jnp.dot(h, p["w1s"][l], preferred_element_type=jnp.float32)
        z = jnp.dot(adj_p, y.astype(jnp.bfloat16),
                    preferred_element_type=jnp.float32) + p["b1s"][l]
        z = _leaky(z)
        z = z * p["s1s"][l] + p["t1s"][l]
        z = jnp.dot(z.astype(jnp.bfloat16), p["w2s"][l],
                    preferred_element_type=jnp.float32) + p["b2s"][l]
        h = _leaky(z).astype(jnp.bfloat16)
    pooled = jnp.dot(pmat_p, h, preferred_element_type=jnp.float32)
    pooled = pooled * p["bn_s"] + p["bn_t"]
    return jnp.dot(pooled.astype(jnp.bfloat16), p["fc_w"],
                   preferred_element_type=jnp.float32) + p["fc_b"]


# ----------------------------------------------------------------------------
# Demo
# ----------------------------------------------------------------------------
if __name__ == "__main__":
    key = jax.random.PRNGKey(0)

    N = 16          # total nodes across the batch of graphs
    E = 40          # number of directed edges
    NUM_GRAPHS = 2
    INPUT_DIM, HIDDEN_DIM, LATENT_DIM, N_LAYERS = 8, 32, 16, 2

    key, kx, ksrc, kdst, kp = jax.random.split(key, 5)
    x = jax.random.normal(kx, (N, INPUT_DIM), jnp.float32)          # data.x
    src = jax.random.randint(ksrc, (E,), 0, N)                      # edge_index[0]
    dst = jax.random.randint(kdst, (E,), 0, N)                      # edge_index[1]
    batch = jnp.repeat(jnp.arange(NUM_GRAPHS), N // NUM_GRAPHS)     # data.batch

    # Dense adjacency with the GIN self term folded in (exact integer counts):
    #   A'[i, j] = #edges j->i, plus (1 + eps) on the diagonal (eps = 0).
    counts = jnp.zeros((N, N), jnp.int32).at[dst, src].add(1)
    adj_plus_i = counts + jnp.eye(N, dtype=jnp.int32)
    adj_plus_f = adj_plus_i.astype(jnp.float32)
    # Pooling matrix for global_add_pool: P[g, n] = 1 iff batch[n] == g.
    pmat = jax.nn.one_hot(batch, NUM_GRAPHS, dtype=jnp.float32).T

    params = init_params(kp, INPUT_DIM, HIDDEN_DIM, LATENT_DIM, N_LAYERS)

    # ---- fused small-graph path (primary result); node dim padded to a
    #      multiple of 128 for lane-dense, bf16-native tiles ----
    npad_f = _round_up(N, 128)
    adj_f = pad2(adj_plus_f, npad_f, npad_f).astype(jnp.bfloat16)
    x_f = pad2(x, npad_f, HP).astype(jnp.bfloat16)
    pmat_f = pad2(pmat, GP, npad_f).astype(jnp.bfloat16)

    none_out, out = gin_forward(adj_f, x_f, pmat_f, params,
                                num_graphs=NUM_GRAPHS, latent_dim=LATENT_DIM)
    out = jax.block_until_ready(out)

    # ---- tiled large-graph path (same math, gridded reduction; exercised here
    #      with padding to 1024 nodes so both grid axes have >= 2 steps) ----
    TM, TK = 256, 512
    NT = max(_round_up(N, TK), 2 * TK)          # 1024 -> grid (4, 2)
    adj_t = pad2(adj_plus_i, NT, NT).astype(jnp.int8)   # int8 adjacency in HBM
    h_t = pad2(x, NT, HP).astype(jnp.bfloat16)
    pmat_t = pad2(pmat, GP, NT).astype(jnp.bfloat16)
    for l in range(N_LAYERS):
        h_t = gin_conv_tiled(adj_t, h_t,
                             params["w1s"][l], params["b1s"][l],
                             params["s1s"][l], params["t1s"][l],
                             params["w2s"][l], params["b2s"][l], tm=TM, tk=TK)
    out_t = pool_head(pmat_t, h_t, params["bn_s"], params["bn_t"],
                      params["fc_w"], params["fc_b"])
    out_t = jax.block_until_ready(out_t)[:NUM_GRAPHS, :LATENT_DIM]

    # ---- checks ----
    ref = reference_forward(adj_f, x_f, pmat_f, params)[:NUM_GRAPHS, :LATENT_DIM]

    assert none_out is None
    assert out.shape == (NUM_GRAPHS, LATENT_DIM)
    assert out.dtype == jnp.float32
    assert bool(jnp.all(jnp.isfinite(out)))
    assert bool(jnp.all(jnp.isfinite(out_t)))
    assert bool(jnp.allclose(out, ref, atol=1e-1, rtol=1e-1))
    assert bool(jnp.allclose(out_t, out, atol=1.5e-1, rtol=1.5e-1))
    print("KERNEL_OK")
</pallas_src>

<mosaic_0001>
module attributes {stable_mosaic.version = 11 : i64} {
  func.func @fused_gin_kernel(%arg0: memref<128x128xbf16, #tpu.memory_space<vmem>>, %arg1: memref<128x128xbf16, #tpu.memory_space<vmem>>, %arg2: memref<2x128x128xbf16, #tpu.memory_space<vmem>>, %arg3: memref<2x1x128xf32, #tpu.memory_space<vmem>>, %arg4: memref<2x1x128xf32, #tpu.memory_space<vmem>>, %arg5: memref<2x1x128xf32, #tpu.memory_space<vmem>>, %arg6: memref<2x128x128xbf16, #tpu.memory_space<vmem>>, %arg7: memref<2x1x128xf32, #tpu.memory_space<vmem>>, %arg8: memref<8x128xbf16, #tpu.memory_space<vmem>>, %arg9: memref<1x128xf32, #tpu.memory_space<vmem>>, %arg10: memref<1x128xf32, #tpu.memory_space<vmem>>, %arg11: memref<128x128xbf16, #tpu.memory_space<vmem>>, %arg12: memref<1x128xf32, #tpu.memory_space<vmem>>, %arg13: memref<8x128xf32, #tpu.memory_space<vmem>>) attributes {dimension_semantics = [], scalar_prefetch = 0 : i64, scratch_operands = 0 : i64, tpu.core_type = #tpu.core_type<tc>} {
    %c0 = arith.constant 0 : index
    %c0_0 = arith.constant 0 : index
    %0 = vector.load %arg0[%c0, %c0_0] : memref<128x128xbf16, #tpu.memory_space<vmem>>, vector<128x128xbf16>
    %c0_1 = arith.constant 0 : index
    %c0_2 = arith.constant 0 : index
    %1 = vector.load %arg1[%c0_1, %c0_2] : memref<128x128xbf16, #tpu.memory_space<vmem>>, vector<128x128xbf16>
    %c0_3 = arith.constant 0 : index
    %c0_4 = arith.constant 0 : index
    %c0_5 = arith.constant 0 : index
    %2 = vector.load %arg2[%c0_3, %c0_4, %c0_5] : memref<2x128x128xbf16, #tpu.memory_space<vmem>>, vector<1x128x128xbf16>
    %3 = vector.shape_cast %2 : vector<1x128x128xbf16> to vector<128x128xbf16>
    %cst = arith.constant dense<0.000000e+00> : vector<128x128xf32>
    %4 = tpu.matmul %1, %3, %cst {dimension_numbers = #tpu.dot_dimension_numbers<[1], [0], [0], [1], [0, 0, 1, 1], [], []>} : vector<128x128xbf16>, vector<128x128xbf16>, vector<128x128xf32> -> vector<128x128xf32>
    %5 = arith.truncf %4 : vector<128x128xf32> to vector<128x128xbf16>
    %cst_6 = arith.constant dense<0.000000e+00> : vector<128x128xf32>
    %6 = tpu.matmul %0, %5, %cst_6 {dimension_numbers = #tpu.dot_dimension_numbers<[1], [0], [0], [1], [0, 0, 1, 1], [], []>} : vector<128x128xbf16>, vector<128x128xbf16>, vector<128x128xf32> -> vector<128x128xf32>
    %c0_7 = arith.constant 0 : index
    %c0_8 = arith.constant 0 : index
    %c0_9 = arith.constant 0 : index
    %7 = vector.load %arg3[%c0_7, %c0_8, %c0_9] : memref<2x1x128xf32, #tpu.memory_space<vmem>>, vector<1x1x128xf32>
    %8 = vector.shape_cast %7 : vector<1x1x128xf32> to vector<1x128xf32>
    %9 = vector.broadcast %8 : vector<1x128xf32> to vector<128x128xf32>
    %10 = arith.addf %6, %9 : vector<128x128xf32>
    %cst_10 = arith.constant 0.000000e+00 : f32
    %11 = vector.broadcast %cst_10 : f32 to vector<128x128xf32>
    %12 = arith.maximumf %10, %11 : vector<128x128xf32>
    %cst_11 = arith.constant 0.000000e+00 : f32
    %13 = vector.broadcast %cst_11 : f32 to vector<128x128xf32>
    %14 = arith.minimumf %10, %13 : vector<128x128xf32>
    %cst_12 = arith.constant 2.000000e-01 : f32
    %15 = vector.broadcast %cst_12 : f32 to vector<128x128xf32>
    %16 = arith.mulf %15, %14 : vector<128x128xf32>
    %17 = arith.addf %12, %16 : vector<128x128xf32>
    %c0_13 = arith.constant 0 : index
    %c0_14 = arith.constant 0 : index
    %c0_15 = arith.constant 0 : index
    %18 = vector.load %arg4[%c0_13, %c0_14, %c0_15] : memref<2x1x128xf32, #tpu.memory_space<vmem>>, vector<1x1x128xf32>
    %19 = vector.shape_cast %18 : vector<1x1x128xf32> to vector<1x128xf32>
    %20 = vector.broadcast %19 : vector<1x128xf32> to vector<128x128xf32>
    %21 = arith.mulf %17, %20 : vector<128x128xf32>
    %c0_16 = arith.constant 0 : index
    %c0_17 = arith.constant 0 : index
    %c0_18 = arith.constant 0 : index
    %22 = vector.load %arg5[%c0_16, %c0_17, %c0_18] : memref<2x1x128xf32, #tpu.memory_space<vmem>>, vector<1x1x128xf32>
    %23 = vector.shape_cast %22 : vector<1x1x128xf32> to vector<1x128xf32>
    %24 = vector.broadcast %23 : vector<1x128xf32> to vector<128x128xf32>
    %25 = arith.addf %21, %24 : vector<128x128xf32>
    %26 = arith.truncf %25 : vector<128x128xf32> to vector<128x128xbf16>
    %c0_19 = arith.constant 0 : index
    %c0_20 = arith.constant 0 : index
    %c0_21 = arith.constant 0 : index
    %27 = vector.load %arg6[%c0_19, %c0_20, %c0_21] : memref<2x128x128xbf16, #tpu.memory_space<vmem>>, vector<1x128x128xbf16>
    %28 = vector.shape_cast %27 : vector<1x128x128xbf16> to vector<128x128xbf16>
    %cst_22 = arith.constant dense<0.000000e+00> : vector<128x128xf32>
    %29 = tpu.matmul %26, %28, %cst_22 {dimension_numbers = #tpu.dot_dimension_numbers<[1], [0], [0], [1], [0, 0, 1, 1], [], []>} : vector<128x128xbf16>, vector<128x128xbf16>, vector<128x128xf32> -> vector<128x128xf32>
    %c0_23 = arith.constant 0 : index
    %c0_24 = arith.constant 0 : index
    %c0_25 = arith.constant 0 : index
    %30 = vector.load %arg7[%c0_23, %c0_24, %c0_25] : memref<2x1x128xf32, #tpu.memory_space<vmem>>, vector<1x1x128xf32>
    %31 = vector.shape_cast %30 : vector<1x1x128xf32> to vector<1x128xf32>
    %32 = vector.broadcast %31 : vector<1x128xf32> to vector<128x128xf32>
    %33 = arith.addf %29, %32 : vector<128x128xf32>
    %cst_26 = arith.constant 0.000000e+00 : f32
    %34 = vector.broadcast %cst_26 : f32 to vector<128x128xf32>
    %35 = arith.maximumf %33, %34 : vector<128x128xf32>
    %cst_27 = arith.constant 0.000000e+00 : f32
    %36 = vector.broadcast %cst_27 : f32 to vector<128x128xf32>
    %37 = arith.minimumf %33, %36 : vector<128x128xf32>
    %cst_28 = arith.constant 2.000000e-01 : f32
    %38 = vector.broadcast %cst_28 : f32 to vector<128x128xf32>
    %39 = arith.mulf %38, %37 : vector<128x128xf32>
    %40 = arith.addf %35, %39 : vector<128x128xf32>
    %41 = arith.truncf %40 : vector<128x128xf32> to vector<128x128xbf16>
    %c1 = arith.constant 1 : index
    %c0_29 = arith.constant 0 : index
    %c0_30 = arith.constant 0 : index
    %42 = vector.load %arg2[%c1, %c0_29, %c0_30] : memref<2x128x128xbf16, #tpu.memory_space<vmem>>, vector<1x128x128xbf16>
    %43 = vector.shape_cast %42 : vector<1x128x128xbf16> to vector<128x128xbf16>
    %cst_31 = arith.constant dense<0.000000e+00> : vector<128x128xf32>
    %44 = tpu.matmul %41, %43, %cst_31 {dimension_numbers = #tpu.dot_dimension_numbers<[1], [0], [0], [1], [0, 0, 1, 1], [], []>} : vector<128x128xbf16>, vector<128x128xbf16>, vector<128x128xf32> -> vector<128x128xf32>
    %45 = arith.truncf %44 : vector<128x128xf32> to vector<128x128xbf16>
    %cst_32 = arith.constant dense<0.000000e+00> : vector<128x128xf32>
    %46 = tpu.matmul %0, %45, %cst_32 {dimension_numbers = #tpu.dot_dimension_numbers<[1], [0], [0], [1], [0, 0, 1, 1], [], []>} : vector<128x128xbf16>, vector<128x128xbf16>, vector<128x128xf32> -> vector<128x128xf32>
    %c1_33 = arith.constant 1 : index
    %c0_34 = arith.constant 0 : index
    %c0_35 = arith.constant 0 : index
    %47 = vector.load %arg3[%c1_33, %c0_34, %c0_35] : memref<2x1x128xf32, #tpu.memory_space<vmem>>, vector<1x1x128xf32>
    %48 = vector.shape_cast %47 : vector<1x1x128xf32> to vector<1x128xf32>
    %49 = vector.broadcast %48 : vector<1x128xf32> to vector<128x128xf32>
    %50 = arith.addf %46, %49 : vector<128x128xf32>
    %cst_36 = arith.constant 0.000000e+00 : f32
    %51 = vector.broadcast %cst_36 : f32 to vector<128x128xf32>
    %52 = arith.maximumf %50, %51 : vector<128x128xf32>
    %cst_37 = arith.constant 0.000000e+00 : f32
    %53 = vector.broadcast %cst_37 : f32 to vector<128x128xf32>
    %54 = arith.minimumf %50, %53 : vector<128x128xf32>
    %cst_38 = arith.constant 2.000000e-01 : f32
    %55 = vector.broadcast %cst_38 : f32 to vector<128x128xf32>
    %56 = arith.mulf %55, %54 : vector<128x128xf32>
    %57 = arith.addf %52, %56 : vector<128x128xf32>
    %c1_39 = arith.constant 1 : index
    %c0_40 = arith.constant 0 : index
    %c0_41 = arith.constant 0 : index
    %58 = vector.load %arg4[%c1_39, %c0_40, %c0_41] : memref<2x1x128xf32, #tpu.memory_space<vmem>>, vector<1x1x128xf32>
    %59 = vector.shape_cast %58 : vector<1x1x128xf32> to vector<1x128xf32>
    %60 = vector.broadcast %59 : vector<1x128xf32> to vector<128x128xf32>
    %61 = arith.mulf %57, %60 : vector<128x128xf32>
    %c1_42 = arith.constant 1 : index
    %c0_43 = arith.constant 0 : index
    %c0_44 = arith.constant 0 : index
    %62 = vector.load %arg5[%c1_42, %c0_43, %c0_44] : memref<2x1x128xf32, #tpu.memory_space<vmem>>, vector<1x1x128xf32>
    %63 = vector.shape_cast %62 : vector<1x1x128xf32> to vector<1x128xf32>
    %64 = vector.broadcast %63 : vector<1x128xf32> to vector<128x128xf32>
    %65 = arith.addf %61, %64 : vector<128x128xf32>
    %66 = arith.truncf %65 : vector<128x128xf32> to vector<128x128xbf16>
    %c1_45 = arith.constant 1 : index
    %c0_46 = arith.constant 0 : index
    %c0_47 = arith.constant 0 : index
    %67 = vector.load %arg6[%c1_45, %c0_46, %c0_47] : memref<2x128x128xbf16, #tpu.memory_space<vmem>>, vector<1x128x128xbf16>
    %68 = vector.shape_cast %67 : vector<1x128x128xbf16> to vector<128x128xbf16>
    %cst_48 = arith.constant dense<0.000000e+00> : vector<128x128xf32>
    %69 = tpu.matmul %66, %68, %cst_48 {dimension_numbers = #tpu.dot_dimension_numbers<[1], [0], [0], [1], [0, 0, 1, 1], [], []>} : vector<128x128xbf16>, vector<128x128xbf16>, vector<128x128xf32> -> vector<128x128xf32>
    %c1_49 = arith.constant 1 : index
    %c0_50 = arith.constant 0 : index
    %c0_51 = arith.constant 0 : index
    %70 = vector.load %arg7[%c1_49, %c0_50, %c0_51] : memref<2x1x128xf32, #tpu.memory_space<vmem>>, vector<1x1x128xf32>
    %71 = vector.shape_cast %70 : vector<1x1x128xf32> to vector<1x128xf32>
    %72 = vector.broadcast %71 : vector<1x128xf32> to vector<128x128xf32>
    %73 = arith.addf %69, %72 : vector<128x128xf32>
    %cst_52 = arith.constant 0.000000e+00 : f32
    %74 = vector.broadcast %cst_52 : f32 to vector<128x128xf32>
    %75 = arith.maximumf %73, %74 : vector<128x128xf32>
    %cst_53 = arith.constant 0.000000e+00 : f32
    %76 = vector.broadcast %cst_53 : f32 to vector<128x128xf32>
    %77 = arith.minimumf %73, %76 : vector<128x128xf32>
    %cst_54 = arith.constant 2.000000e-01 : f32
    %78 = vector.broadcast %cst_54 : f32 to vector<128x128xf32>
    %79 = arith.mulf %78, %77 : vector<128x128xf32>
    %80 = arith.addf %75, %79 : vector<128x128xf32>
    %81 = arith.truncf %80 : vector<128x128xf32> to vector<128x128xbf16>
    %c0_55 = arith.constant 0 : index
    %c0_56 = arith.constant 0 : index
    %82 = vector.load %arg8[%c0_55, %c0_56] : memref<8x128xbf16, #tpu.memory_space<vmem>>, vector<8x128xbf16>
    %cst_57 = arith.constant dense<0.000000e+00> : vector<8x128xf32>
    %83 = tpu.matmul %82, %81, %cst_57 {dimension_numbers = #tpu.dot_dimension_numbers<[1], [0], [0], [1], [0, 0, 1, 1], [], []>} : vector<8x128xbf16>, vector<128x128xbf16>, vector<8x128xf32> -> vector<8x128xf32>
    %c0_58 = arith.constant 0 : index
    %c0_59 = arith.constant 0 : index
    %84 = vector.load %arg9[%c0_58, %c0_59] : memref<1x128xf32, #tpu.memory_space<vmem>>, vector<1x128xf32>
    %85 = vector.broadcast %84 : vector<1x128xf32> to vector<8x128xf32>
    %86 = arith.mulf %83, %85 : vector<8x128xf32>
    %c0_60 = arith.constant 0 : index
    %c0_61 = arith.constant 0 : index
    %87 = vector.load %arg10[%c0_60, %c0_61] : memref<1x128xf32, #tpu.memory_space<vmem>>, vector<1x128xf32>
    %88 = vector.broadcast %87 : vector<1x128xf32> to vector<8x128xf32>
    %89 = arith.addf %86, %88 : vector<8x128xf32>
    %90 = arith.truncf %89 : vector<8x128xf32> to vector<8x128xbf16>
    %c0_62 = arith.constant 0 : index
    %c0_63 = arith.constant 0 : index
    %91 = vector.load %arg11[%c0_62, %c0_63] : memref<128x128xbf16, #tpu.memory_space<vmem>>, vector<128x128xbf16>
    %cst_64 = arith.constant dense<0.000000e+00> : vector<8x128xf32>
    %92 = tpu.matmul %90, %91, %cst_64 {dimension_numbers = #tpu.dot_dimension_numbers<[1], [0], [0], [1], [0, 0, 1, 1], [], []>} : vector<8x128xbf16>, vector<128x128xbf16>, vector<8x128xf32> -> vector<8x128xf32>
    %c0_65 = arith.constant 0 : index
    %c0_66 = arith.constant 0 : index
    %93 = vector.load %arg12[%c0_65, %c0_66] : memref<1x128xf32, #tpu.memory_space<vmem>>, vector<1x128xf32>
    %94 = vector.broadcast %93 : vector<1x128xf32> to vector<8x128xf32>
    %95 = arith.addf %92, %94 : vector<8x128xf32>
    %c0_67 = arith.constant 0 : index
    %c0_68 = arith.constant 0 : index
    %96 = vector.load %arg13[%c0_67, %c0_68] : memref<8x128xf32, #tpu.memory_space<vmem>>, vector<8x128xf32>
    tpu.vector_store %arg13[%c0_67, %c0_68], %95 {strides = array<i32>} : memref<8x128xf32, #tpu.memory_space<vmem>>, vector<8x128xf32>,
    return
  }
}

</mosaic_0001>

<llo_original>
// kernel: tpu_custom_call.1
$region0: #{tpu_custom_call.1}
  #allocation0 [shape = 'u32[]', space=smem, size = 0x4, offset = 0x4, fixed_abs, tag = 'smem constant byte address 0x4 - core index']
  #allocation1 [shape = 'u32[72,128]{1,0:T(1,128)}', space=vmem, size = 0x9000, scoped, tag = 'internal scratch']
  %s0 = inlined_call_operand.hbm [shape: bf16[128,128], index: 0, kind: input, shape index: {}]
  %s1 = inlined_call_operand.hbm [shape: bf16[128,128], index: 1, kind: input, shape index: {}]
  %s2 = inlined_call_operand.hbm [shape: bf16[2,128,128], index: 2, kind: input, shape index: {}]
  %s3 = inlined_call_operand.vmem [shape: f32[2,1,128], index: 3, kind: input, shape index: {}]
  %s4 = inlined_call_operand.hbm [shape: f32[2,1,128], index: 4, kind: input, shape index: {}]
  %s5 = inlined_call_operand.hbm [shape: f32[2,1,128], index: 5, kind: input, shape index: {}]
  %s6 = inlined_call_operand.hbm [shape: bf16[2,128,128], index: 6, kind: input, shape index: {}]
  %s7 = inlined_call_operand.hbm [shape: f32[2,1,128], index: 7, kind: input, shape index: {}]
  %s8 = inlined_call_operand.vmem [shape: bf16[8,128], index: 8, kind: input, shape index: {}]
  %s9 = inlined_call_operand.vmem [shape: f32[1,128], index: 9, kind: input, shape index: {}]
  %s10 = inlined_call_operand.vmem [shape: f32[1,128], index: 10, kind: input, shape index: {}]
  %s11 = inlined_call_operand.hbm [shape: bf16[128,128], index: 11, kind: input, shape index: {}]
  %s12 = inlined_call_operand.vmem [shape: f32[1,128], index: 12, kind: input, shape index: {}]
  %s13 = inlined_call_operand.hbm [shape: f32[8,128], index: 13, kind: output, shape index: {}]
  %s14 = sld [smem:[#allocation0]]
  $region94: #{tpu_custom_call.1} parent=0
    _
  %s16 = ssub.s32 1, %s14
  %s17 = scalar_select 0, %s16, %s14
  $region1: #{tpu_custom_call.1} parent=0
    #allocation2 [shape = 'u8[32768]{0}', space=vmem, size = 0x8000, scoped, tag = 'input window, operand 0, single buffered']
    #allocation3 [shape = 's32[1]{0}', space=sflag, size = 0x4, scoped, tag = 'scoped memory for tpu_custom_call.1']
    #allocation4 [shape = 's32[1]{0}', space=sflag, size = 0x4, scoped, tag = 'scoped memory for tpu_custom_call.1']
    #allocation5 [shape = 'u8[32768]{0}', space=vmem, size = 0x8000, scoped, tag = 'input window, operand 1, single buffered']
    #allocation6 [shape = 's32[1]{0}', space=sflag, size = 0x4, scoped, tag = 'scoped memory for tpu_custom_call.1']
    #allocation7 [shape = 'u8[65536]{0}', space=vmem, size = 0x10000, scoped, tag = 'input window, operand 2, single buffered']
    #allocation8 [shape = 'u8[1024]{0}', space=vmem, size = 0x400, scoped, tag = 'input window, operand 4, single buffered']
    #allocation9 [shape = 's32[1]{0}', space=sflag, size = 0x4, scoped, tag = 'scoped memory for tpu_custom_call.1']
    #allocation10 [shape = 'u8[1024]{0}', space=vmem, size = 0x400, scoped, tag = 'input window, operand 5, single buffered']
    #allocation11 [shape = 'u8[65536]{0}', space=vmem, size = 0x10000, scoped, tag = 'input window, operand 6, single buffered']
    #allocation12 [shape = 's32[1]{0}', space=sflag, size = 0x4, scoped, tag = 'scoped memory for tpu_custom_call.1']
    #allocation13 [shape = 'u8[1024]{0}', space=vmem, size = 0x400, scoped, tag = 'input window, operand 7, single buffered']
    #allocation14 [shape = 'u8[32768]{0}', space=vmem, size = 0x8000, scoped, tag = 'input window, operand 11, single buffered']
    #allocation15 [shape = 's32[1]{0}', space=sflag, size = 0x4, scoped, tag = 'scoped memory for tpu_custom_call.1']
    #allocation16 [shape = 'u8[4096]{0}', space=vmem, size = 0x1000, scoped, tag = 'output window, operand 0, single buffered']
    %18 = vsyncpa [#allocation3], 0
    %19 = vsyncpa [#allocation6], 0
    %20 = vsyncpa [#allocation9], 0
    %21 = vsyncpa [#allocation12], 0
    %22 = vsyncpa [#allocation15], 0
    %23 = vsyncpa [#allocation4], 0
    // Predicated region
    $region2: #{tpu_custom_call.1} parent=1 // pred_check
      _
    $region3: #{tpu_custom_call.1} parent=1 // pred_check_branch
      %25 = sbr.rel (0) target = $region5
    $region4: #{tpu_custom_call.1} parent=1 // pred_region
      %27 = vsyncadd [#allocation3], 0
      %s28 = sshll.u32 %s0, 4
      %s29 = int_to_ptr.hbm [resolvable:$true] %s28
      %s30 = sshll.u32 [#allocation2], 4
      %s31 = int_to_ptr.vmem [resolvable:$true] %s30
      %36 = dma.hbm_to_vmem [thread:$0]  %s29, 1024, %s31, [#allocation3], 64, 64, 4
    $region5: #{tpu_custom_call.1} parent=1 // pred_fallthru
      _
    // Predicated region
    $region6: #{tpu_custom_call.1} parent=1 // pred_check
      _
    $region7: #{tpu_custom_call.1} parent=1 // pred_check_branch
      %38 = sbr.rel (0) target = $region9
    $region8: #{tpu_custom_call.1} parent=1 // pred_region
      %40 = vsyncadd [#allocation6], 0
      %s41 = sshll.u32 %s1, 4
      %s42 = int_to_ptr.hbm [resolvable:$true] %s41
      %s43 = sshll.u32 [#allocation5], 4
      %s44 = int_to_ptr.vmem [resolvable:$true] %s43
      %49 = dma.hbm_to_vmem [thread:$0]  %s42, 1024, %s44, [#allocation6], 64, 64, 4
    $region9: #{tpu_custom_call.1} parent=1 // pred_fallthru
      _
    // Predicated region
    $region10: #{tpu_custom_call.1} parent=1 // pred_check
      _
    $region11: #{tpu_custom_call.1} parent=1 // pred_check_branch
      %51 = sbr.rel (0) target = $region13
    $region12: #{tpu_custom_call.1} parent=1 // pred_region
      %53 = vsyncadd [#allocation6], 0
      %s54 = sshll.u32 %s2, 4
      %s55 = int_to_ptr.hbm [resolvable:$true] %s54
      %s56 = sshll.u32 [#allocation7], 4
      %s57 = int_to_ptr.vmem [resolvable:$true] %s56
      %62 = dma.hbm_to_vmem [thread:$0]  %s55, 2048, %s57, [#allocation6], 64, 64, 4
    $region13: #{tpu_custom_call.1} parent=1 // pred_fallthru
      _
    // Predicated region
    $region14: #{tpu_custom_call.1} parent=1 // pred_check
      _
    $region15: #{tpu_custom_call.1} parent=1 // pred_check_branch
      %64 = sbr.rel (0) target = $region17
    $region16: #{tpu_custom_call.1} parent=1 // pred_region
      _
    $region17: #{tpu_custom_call.1} parent=1 // pred_fallthru
      _
    // Predicated region
    $region18: #{tpu_custom_call.1} parent=1 // pred_check
      _
    $region19: #{tpu_custom_call.1} parent=1 // pred_check_branch
      %66 = sbr.rel (0) target = $region21
    $region20: #{tpu_custom_call.1} parent=1 // pred_region
      %68 = vsyncadd [#allocation9], 0
      %s69 = sshll.u32 %s4, 4
      %s70 = int_to_ptr.hbm [resolvable:$true] %s69
      %s71 = sshll.u32 [#allocation8], 4
      %s72 = int_to_ptr.vmem [resolvable:$true] %s71
      %77 = dma.hbm_to_vmem [thread:$0]  %s70, 32, %s72, [#allocation9], 16, 16, 1
    $region21: #{tpu_custom_call.1} parent=1 // pred_fallthru
      _
    // Predicated region
    $region22: #{tpu_custom_call.1} parent=1 // pred_check
      _
    $region23: #{tpu_custom_call.1} parent=1 // pred_check_branch
      %79 = sbr.rel (0) target = $region25
    $region24: #{tpu_custom_call.1} parent=1 // pred_region
      %81 = vsyncadd [#allocation9], 0
      %s82 = sshll.u32 %s5, 4
      %s83 = int_to_ptr.hbm [resolvable:$true] %s82
      %s84 = sshll.u32 [#allocation10], 4
      %s85 = int_to_ptr.vmem [resolvable:$true] %s84
      %90 = dma.hbm_to_vmem [thread:$0]  %s83, 32, %s85, [#allocation9], 16, 16, 1
    $region25: #{tpu_custom_call.1} parent=1 // pred_fallthru
      _
    // Predicated region
    $region26: #{tpu_custom_call.1} parent=1 // pred_check
      _
    $region27: #{tpu_custom_call.1} parent=1 // pred_check_branch
      %92 = sbr.rel (0) target = $region29
    $region28: #{tpu_custom_call.1} parent=1 // pred_region
      %94 = vsyncadd [#allocation12], 0
      %s95 = sshll.u32 %s6, 4
      %s96 = int_to_ptr.hbm [resolvable:$true] %s95
      %s97 = sshll.u32 [#allocation11], 4
      %s98 = int_to_ptr.vmem [resolvable:$true] %s97
      %103 = dma.hbm_to_vmem [thread:$0]  %s96, 2048, %s98, [#allocation12], 64, 64, 4
    $region29: #{tpu_custom_call.1} parent=1 // pred_fallthru
      _
    // Predicated region
    $region30: #{tpu_custom_call.1} parent=1 // pred_check
      _
    $region31: #{tpu_custom_call.1} parent=1 // pred_check_branch
      %105 = sbr.rel (0) target = $region33
    $region32: #{tpu_custom_call.1} parent=1 // pred_region
      %107 = vsyncadd [#allocation12], 0
      %s108 = sshll.u32 %s7, 4
      %s109 = int_to_ptr.hbm [resolvable:$true] %s108
      %s110 = sshll.u32 [#allocation13], 4
      %s111 = int_to_ptr.vmem [resolvable:$true] %s110
      %116 = dma.hbm_to_vmem [thread:$0]  %s109, 32, %s111, [#allocation12], 16, 16, 1
    $region33: #{tpu_custom_call.1} parent=1 // pred_fallthru
      _
    // Predicated region
    $region34: #{tpu_custom_call.1} parent=1 // pred_check
      _
    $region35: #{tpu_custom_call.1} parent=1 // pred_check_branch
      %118 = sbr.rel (0) target = $region37
    $region36: #{tpu_custom_call.1} parent=1 // pred_region
      _
    $region37: #{tpu_custom_call.1} parent=1 // pred_fallthru
      _
    // Predicated region
    $region38: #{tpu_custom_call.1} parent=1 // pred_check
      _
    $region39: #{tpu_custom_call.1} parent=1 // pred_check_branch
      %120 = sbr.rel (0) target = $region41
    $region40: #{tpu_custom_call.1} parent=1 // pred_region
      _
    $region41: #{tpu_custom_call.1} parent=1 // pred_fallthru
      _
    // Predicated region
    $region42: #{tpu_custom_call.1} parent=1 // pred_check
      _
    $region43: #{tpu_custom_call.1} parent=1 // pred_check_branch
      %122 = sbr.rel (0) target = $region45
    $region44: #{tpu_custom_call.1} parent=1 // pred_region
      _
    $region45: #{tpu_custom_call.1} parent=1 // pred_fallthru
      _
    // Predicated region
    $region46: #{tpu_custom_call.1} parent=1 // pred_check
      _
    $region47: #{tpu_custom_call.1} parent=1 // pred_check_branch
      %124 = sbr.rel (0) target = $region49
    $region48: #{tpu_custom_call.1} parent=1 // pred_region
      %126 = vsyncadd [#allocation15], 0
      %s127 = sshll.u32 %s11, 4
      %s128 = int_to_ptr.hbm [resolvable:$true] %s127
      %s129 = sshll.u32 [#allocation14], 4
      %s130 = int_to_ptr.vmem [resolvable:$true] %s129
      %135 = dma.hbm_to_vmem [thread:$0]  %s128, 1024, %s130, [#allocation15], 64, 64, 4
    $region49: #{tpu_custom_call.1} parent=1 // pred_fallthru
      _
    // Predicated region
    $region50: #{tpu_custom_call.1} parent=1 // pred_check
      _
    $region51: #{tpu_custom_call.1} parent=1 // pred_check_branch
      %137 = sbr.rel (0) target = $region53
    $region52: #{tpu_custom_call.1} parent=1 // pred_region
      _
    $region53: #{tpu_custom_call.1} parent=1 // pred_fallthru
      _
    // Predicated region
    $region54: #{tpu_custom_call.1} parent=1 // pred_check
      _
    $region55: #{tpu_custom_call.1} parent=1 // pred_check_branch
      %139 = sbr.rel (0) target = $region57
    $region56: #{tpu_custom_call.1} parent=1 // pred_region
      %141 = dma.done [#allocation3], 1024
    $region57: #{tpu_custom_call.1} parent=1 // pred_fallthru
      _
    // Predicated region
    $region58: #{tpu_custom_call.1} parent=1 // pred_check
      _
    $region59: #{tpu_custom_call.1} parent=1 // pred_check_branch
      %143 = sbr.rel (0) target = $region61
    $region60: #{tpu_custom_call.1} parent=1 // pred_region
      %145 = dma.done [#allocation6], 1024
    $region61: #{tpu_custom_call.1} parent=1 // pred_fallthru
      _
    // Predicated region
    $region62: #{tpu_custom_call.1} parent=1 // pred_check
      _
    $region63: #{tpu_custom_call.1} parent=1 // pred_check_branch
      %147 = sbr.rel (0) target = $region65
    $region64: #{tpu_custom_call.1} parent=1 // pred_region
      %149 = dma.done [#allocation6], 2048
    $region65: #{tpu_custom_call.1} parent=1 // pred_fallthru
      _
    // Predicated region
    $region66: #{tpu_custom_call.1} parent=1 // pred_check
      _
    $region67: #{tpu_custom_call.1} parent=1 // pred_check_branch
      %151 = sbr.rel (0) target = $region69
    $region68: #{tpu_custom_call.1} parent=1 // pred_region
      %153 = dma.done [#allocation9], 32
    $region69: #{tpu_custom_call.1} parent=1 // pred_fallthru
      _
    // Predicated region
    $region70: #{tpu_custom_call.1} parent=1 // pred_check
      _
    $region71: #{tpu_custom_call.1} parent=1 // pred_check_branch
      %155 = sbr.rel (0) target = $region73
    $region72: #{tpu_custom_call.1} parent=1 // pred_region
      %157 = dma.done [#allocation9], 32
    $region73: #{tpu_custom_call.1} parent=1 // pred_fallthru
      _
    // Predicated region
    $region74: #{tpu_custom_call.1} parent=1 // pred_check
      _
    $region75: #{tpu_custom_call.1} parent=1 // pred_check_branch
      %159 = sbr.rel (0) target = $region77
    $region76: #{tpu_custom_call.1} parent=1 // pred_region
      %161 = dma.done [#allocation12], 2048
    $region77: #{tpu_custom_call.1} parent=1 // pred_fallthru
      _
    // Predicated region
    $region78: #{tpu_custom_call.1} parent=1 // pred_check
      _
    $region79: #{tpu_custom_call.1} parent=1 // pred_check_branch
      %163 = sbr.rel (0) target = $region81
    $region80: #{tpu_custom_call.1} parent=1 // pred_region
      %165 = dma.done [#allocation12], 32
    $region81: #{tpu_custom_call.1} parent=1 // pred_fallthru
      _
    // Predicated region
    $region82: #{tpu_custom_call.1} parent=1 // pred_check
      _
    $region83: #{tpu_custom_call.1} parent=1 // pred_check_branch
      %167 = sbr.rel (0) target = $region85
    $region84: #{tpu_custom_call.1} parent=1 // pred_region
      %169 = dma.done [#allocation15], 1024
    $region85: #{tpu_custom_call.1} parent=1 // pred_fallthru
      _
    %v170 = vld [vmem:[#allocation2] sm:$0xf]
    %v171 = vld [vmem:[#allocation2 + $0x4] sm:$0xf]
    %v172 = vld [vmem:[#allocation2 + $0x8] sm:$0xf]
    %v173 = vld [vmem:[#allocation2 + $0xc] sm:$0xf]
    %v174 = vld [vmem:[#allocation2 + $0x10] sm:$0xf]
    %v175 = vld [vmem:[#allocation2 + $0x14] sm:$0xf]
    %v176 = vld [vmem:[#allocation2 + $0x18] sm:$0xf]
    %v177 = vld [vmem:[#allocation2 + $0x1c] sm:$0xf]
    %v178 = vld [vmem:[#allocation2 + $0x20] sm:$0xf]
    %v179 = vld [vmem:[#allocation2 + $0x24] sm:$0xf]
    %v180 = vld [vmem:[#allocation2 + $0x28] sm:$0xf]
    %v181 = vld [vmem:[#allocation2 + $0x2c] sm:$0xf]
    %v182 = vld [vmem:[#allocation2 + $0x30] sm:$0xf]
    %v183 = vld [vmem:[#allocation2 + $0x34] sm:$0xf]
    %v184 = vld [vmem:[#allocation2 + $0x38] sm:$0xf]
    %v185 = vld [vmem:[#allocation2 + $0x3c] sm:$0xf]
    %v186 = vld [vmem:[#allocation5] sm:$0xf]
    %v187 = vld [vmem:[#allocation5 + $0x4] sm:$0xf]
    %v188 = vld [vmem:[#allocation5 + $0x8] sm:$0xf]
    %v189 = vld [vmem:[#allocation5 + $0xc] sm:$0xf]
    %v190 = vld [vmem:[#allocation5 + $0x10] sm:$0xf]
    %v191 = vld [vmem:[#allocation5 + $0x14] sm:$0xf]
    %v192 = vld [vmem:[#allocation5 + $0x18] sm:$0xf]
    %v193 = vld [vmem:[#allocation5 + $0x1c] sm:$0xf]
    %v194 = vld [vmem:[#allocation5 + $0x20] sm:$0xf]
    %v195 = vld [vmem:[#allocation5 + $0x24] sm:$0xf]
    %v196 = vld [vmem:[#allocation5 + $0x28] sm:$0xf]
    %v197 = vld [vmem:[#allocation5 + $0x2c] sm:$0xf]
    %v198 = vld [vmem:[#allocation5 + $0x30] sm:$0xf]
    %v199 = vld [vmem:[#allocation5 + $0x34] sm:$0xf]
    %v200 = vld [vmem:[#allocation5 + $0x38] sm:$0xf]
    %v201 = vld [vmem:[#allocation5 + $0x3c] sm:$0xf]
    %v202 = vld [vmem:[#allocation7] sm:$0xf]
    %v203 = vld [vmem:[#allocation7 + $0x4] sm:$0xf]
    %v204 = vld [vmem:[#allocation7 + $0x8] sm:$0xf]
    %v205 = vld [vmem:[#allocation7 + $0xc] sm:$0xf]
    %v206 = vld [vmem:[#allocation7 + $0x10] sm:$0xf]
    %v207 = vld [vmem:[#allocation7 + $0x14] sm:$0xf]
    %v208 = vld [vmem:[#allocation7 + $0x18] sm:$0xf]
    %v209 = vld [vmem:[#allocation7 + $0x1c] sm:$0xf]
    %v210 = vld [vmem:[#allocation7 + $0x20] sm:$0xf]
    %v211 = vld [vmem:[#allocation7 + $0x24] sm:$0xf]
    %v212 = vld [vmem:[#allocation7 + $0x28] sm:$0xf]
    %v213 = vld [vmem:[#allocation7 + $0x2c] sm:$0xf]
    %v214 = vld [vmem:[#allocation7 + $0x30] sm:$0xf]
    %v215 = vld [vmem:[#allocation7 + $0x34] sm:$0xf]
    %v216 = vld [vmem:[#allocation7 + $0x38] sm:$0xf]
    %v217 = vld [vmem:[#allocation7 + $0x3c] sm:$0xf]
    %v234 = vunpack.c.l.b16 %v186
    %v235 = vunpack.c.l.b16 %v187
    %v236 = vunpack.c.l.b16 %v188
    %v237 = vunpack.c.l.b16 %v189
    %v238 = vunpack.c.l.b16 %v190
    %v239 = vunpack.c.l.b16 %v191
    %v240 = vunpack.c.l.b16 %v192
    %v241 = vunpack.c.l.b16 %v193
    %v242 = vunpack.c.l.b16 %v194
    %v243 = vunpack.c.l.b16 %v195
    %v244 = vunpack.c.l.b16 %v196
    %v245 = vunpack.c.l.b16 %v197
    %v246 = vunpack.c.l.b16 %v198
    %v247 = vunpack.c.l.b16 %v199
    %v248 = vunpack.c.l.b16 %v200
    %v249 = vunpack.c.l.b16 %v201
    %v250 = vpack.c.b16 %v235, %v234
    %v251 = vpack.c.b16 %v237, %v236
    %v252 = vpack.c.b16 %v239, %v238
    %v253 = vpack.c.b16 %v241, %v240
    %v254 = vpack.c.b16 %v243, %v242
    %v255 = vpack.c.b16 %v245, %v244
    %v256 = vpack.c.b16 %v247, %v246
    %v257 = vpack.c.b16 %v249, %v248
    %v282 = vunpack.c.l.b16 %v202
    %v283 = vunpack.c.l.b16 %v203
    %v284 = vunpack.c.l.b16 %v204
    %v285 = vunpack.c.l.b16 %v205
    %v286 = vunpack.c.l.b16 %v206
    %v287 = vunpack.c.l.b16 %v207
    %v288 = vunpack.c.l.b16 %v208
    %v289 = vunpack.c.l.b16 %v209
    %v290 = vunpack.c.l.b16 %v210
    %v291 = vunpack.c.l.b16 %v211
    %v292 = vunpack.c.l.b16 %v212
    %v293 = vunpack.c.l.b16 %v213
    %v294 = vunpack.c.l.b16 %v214
    %v295 = vunpack.c.l.b16 %v215
    %v296 = vunpack.c.l.b16 %v216
    %v297 = vunpack.c.l.b16 %v217
    %v298 = vpack.c.b16 %v283, %v282
    %v299 = vpack.c.b16 %v285, %v284
    %v300 = vpack.c.b16 %v287, %v286
    %v301 = vpack.c.b16 %v289, %v288
    %v302 = vpack.c.b16 %v291, %v290
    %v303 = vpack.c.b16 %v293, %v292
    %v304 = vpack.c.b16 %v295, %v294
    %v305 = vpack.c.b16 %v297, %v296
    %314 = vmatpush.bf16.msra.mxu0 %v305
    %315 = vmatpush.bf16.msra.mxu0 %v304
    %316 = vmatpush.bf16.msra.mxu0 %v303
    %317 = vmatpush.bf16.msra.mxu0 %v302
    %318 = vmatpush.bf16.msra.mxu0 %v301
    %319 = vmatpush.bf16.msra.mxu0 %v300
    %320 = vmatpush.bf16.msra.mxu0 %v299
    %321 = vmatpush.bf16.msra.mxu0 %v298
    %322 = vmatmul.bf16.gmra.mxu0 %v250
    %v323 = vpop.f32.mrf.mxu0
    %v324 = vadd.f32 0.0, %v323
    %v325 = vpop.f32.mrf.mxu0
    %v326 = vadd.f32 0.0, %v325
    %327 = vmatmul.bf16.gmra.mxu0 %v251
    %v328 = vpop.f32.mrf.mxu0
    %v329 = vadd.f32 0.0, %v328
    %v330 = vpop.f32.mrf.mxu0
    %v331 = vadd.f32 0.0, %v330
    %332 = vmatmul.bf16.gmra.mxu0 %v252
    %v333 = vpop.f32.mrf.mxu0
    %v334 = vadd.f32 0.0, %v333
    %v335 = vpop.f32.mrf.mxu0
    %v336 = vadd.f32 0.0, %v335
    %337 = vmatmul.bf16.gmra.mxu0 %v253
    %v338 = vpop.f32.mrf.mxu0
    %v339 = vadd.f32 0.0, %v338
    %v340 = vpop.f32.mrf.mxu0
    %v341 = vadd.f32 0.0, %v340
    %342 = vmatmul.bf16.gmra.mxu0 %v254
    %v343 = vpop.f32.mrf.mxu0
    %v344 = vadd.f32 0.0, %v343
    %v345 = vpop.f32.mrf.mxu0
    %v346 = vadd.f32 0.0, %v345
    %347 = vmatmul.bf16.gmra.mxu0 %v255
    %v348 = vpop.f32.mrf.mxu0
    %v349 = vadd.f32 0.0, %v348
    %v350 = vpop.f32.mrf.mxu0
    %v351 = vadd.f32 0.0, %v350
    %352 = vmatmul.bf16.gmra.mxu0 %v256
    %v353 = vpop.f32.mrf.mxu0
    %v354 = vadd.f32 0.0, %v353
    %v355 = vpop.f32.mrf.mxu0
    %v356 = vadd.f32 0.0, %v355
    %357 = vmatmul.bf16.gmra.mxu0 %v257
    %v358 = vpop.f32.mrf.mxu0
    %v359 = vadd.f32 0.0, %v358
    %v360 = vpop.f32.mrf.mxu0
    %v361 = vadd.f32 0.0, %v360
    %362 = vdwg.mxu0
    %v363 = vpack.c.bf16 %v326, %v324
    %v364 = vpack.c.bf16 %v331, %v329
    %v365 = vpack.c.bf16 %v336, %v334
    %v366 = vpack.c.bf16 %v341, %v339
    %v367 = vpack.c.bf16 %v346, %v344
    %v368 = vpack.c.bf16 %v351, %v349
    %v369 = vpack.c.bf16 %v356, %v354
    %v370 = vpack.c.bf16 %v361, %v359
    %v371 = vld [vmem:[%s3] sm:$0x1]
    %v373 = vperm.slane %v371, 0
    %v391 = vunpack.c.l.b16 %v170
    %v392 = vunpack.c.l.b16 %v171
    %v393 = vunpack.c.l.b16 %v172
    %v394 = vunpack.c.l.b16 %v173
    %v395 = vunpack.c.l.b16 %v174
    %v396 = vunpack.c.l.b16 %v175
    %v397 = vunpack.c.l.b16 %v176
    %v398 = vunpack.c.l.b16 %v177
    %v399 = vunpack.c.l.b16 %v178
    %v400 = vunpack.c.l.b16 %v179
    %v401 = vunpack.c.l.b16 %v180
    %v402 = vunpack.c.l.b16 %v181
    %v403 = vunpack.c.l.b16 %v182
    %v404 = vunpack.c.l.b16 %v183
    %v405 = vunpack.c.l.b16 %v184
    %v406 = vunpack.c.l.b16 %v185
    %v407 = vpack.c.b16 %v392, %v391
    %v408 = vpack.c.b16 %v394, %v393
    %v409 = vpack.c.b16 %v396, %v395
    %v410 = vpack.c.b16 %v398, %v397
    %v411 = vpack.c.b16 %v400, %v399
    %v412 = vpack.c.b16 %v402, %v401
    %v413 = vpack.c.b16 %v404, %v403
    %v414 = vpack.c.b16 %v406, %v405
    %423 = vmatpush.bf16.msra.mxu0 %v370
    %424 = vmatpush.bf16.msra.mxu0 %v369
    %425 = vmatpush.bf16.msra.mxu0 %v368
    %426 = vmatpush.bf16.msra.mxu0 %v367
    %427 = vmatpush.bf16.msra.mxu0 %v366
    %428 = vmatpush.bf16.msra.mxu0 %v365
    %429 = vmatpush.bf16.msra.mxu0 %v364
    %430 = vmatpush.bf16.msra.mxu0 %v363
    %431 = vmatmul.bf16.gmra.mxu0 %v407
    %v432 = vpop.f32.mrf.mxu0
    %v433 = vadd.f32 %v373, %v432
    %v434 = vpop.f32.mrf.mxu0
    %v435 = vadd.f32 %v373, %v434
    %436 = vmatmul.bf16.gmra.mxu0 %v408
    %v437 = vpop.f32.mrf.mxu0
    %v438 = vadd.f32 %v373, %v437
    %v439 = vpop.f32.mrf.mxu0
    %v440 = vadd.f32 %v373, %v439
    %441 = vmatmul.bf16.gmra.mxu0 %v409
    %v442 = vpop.f32.mrf.mxu0
    %v443 = vadd.f32 %v373, %v442
    %v444 = vpop.f32.mrf.mxu0
    %v445 = vadd.f32 %v373, %v444
    %446 = vmatmul.bf16.gmra.mxu0 %v410
    %v447 = vpop.f32.mrf.mxu0
    %v448 = vadd.f32 %v373, %v447
    %v449 = vpop.f32.mrf.mxu0
    %v450 = vadd.f32 %v373, %v449
    %451 = vmatmul.bf16.gmra.mxu0 %v411
    %v452 = vpop.f32.mrf.mxu0
    %v453 = vadd.f32 %v373, %v452
    %v454 = vpop.f32.mrf.mxu0
    %v455 = vadd.f32 %v373, %v454
    %456 = vmatmul.bf16.gmra.mxu0 %v412
    %v457 = vpop.f32.mrf.mxu0
    %v458 = vadd.f32 %v373, %v457
    %v459 = vpop.f32.mrf.mxu0
    %v460 = vadd.f32 %v373, %v459
    %461 = vmatmul.bf16.gmra.mxu0 %v413
    %v462 = vpop.f32.mrf.mxu0
    %v463 = vadd.f32 %v373, %v462
    %v464 = vpop.f32.mrf.mxu0
    %v465 = vadd.f32 %v373, %v464
    %466 = vmatmul.bf16.gmra.mxu0 %v414
    %v467 = vpop.f32.mrf.mxu0
    %v468 = vadd.f32 %v373, %v467
    %v469 = vpop.f32.mrf.mxu0
    %v470 = vadd.f32 %v373, %v469
    %471 = vdwg.mxu0
    %v472 = vmax.f32 %v433, 0.0
    %v473 = vmax.f32 %v435, 0.0
    %v474 = vmax.f32 %v438, 0.0
    %v475 = vmax.f32 %v440, 0.0
    %v476 = vmax.f32 %v443, 0.0
    %v477 = vmax.f32 %v445, 0.0
    %v478 = vmax.f32 %v448, 0.0
    %v479 = vmax.f32 %v450, 0.0
    %v480 = vmax.f32 %v453, 0.0
    %v481 = vmax.f32 %v455, 0.0
    %v482 = vmax.f32 %v458, 0.0
    %v483 = vmax.f32 %v460, 0.0
    %v484 = vmax.f32 %v463, 0.0
    %v485 = vmax.f32 %v465, 0.0
    %v486 = vmax.f32 %v468, 0.0
    %v487 = vmax.f32 %v470, 0.0
    %v488 = vmin.f32 %v433, 0.0
    %v489 = vmin.f32 %v435, 0.0
    %v490 = vmin.f32 %v438, 0.0
    %v491 = vmin.f32 %v440, 0.0
    %v492 = vmin.f32 %v443, 0.0
    %v493 = vmin.f32 %v445, 0.0
    %v494 = vmin.f32 %v448, 0.0
    %v495 = vmin.f32 %v450, 0.0
    %v496 = vmin.f32 %v453, 0.0
    %v497 = vmin.f32 %v455, 0.0
    %v498 = vmin.f32 %v458, 0.0
    %v499 = vmin.f32 %v460, 0.0
    %v500 = vmin.f32 %v463, 0.0
    %v501 = vmin.f32 %v465, 0.0
    %v502 = vmin.f32 %v468, 0.0
    %v503 = vmin.f32 %v470, 0.0
    %v504 = vmul.f32 %v488, 0.2
    %v505 = vmul.f32 %v489, 0.2
    %v506 = vmul.f32 %v490, 0.2
    %v507 = vmul.f32 %v491, 0.2
    %v508 = vmul.f32 %v492, 0.2
    %v509 = vmul.f32 %v493, 0.2
    %v510 = vmul.f32 %v494, 0.2
    %v511 = vmul.f32 %v495, 0.2
    %v512 = vmul.f32 %v496, 0.2
    %v513 = vmul.f32 %v497, 0.2
    %v514 = vmul.f32 %v498, 0.2
    %v515 = vmul.f32 %v499, 0.2
    %v516 = vmul.f32 %v500, 0.2
    %v517 = vmul.f32 %v501, 0.2
    %v518 = vmul.f32 %v502, 0.2
    %v519 = vmul.f32 %v503, 0.2
    %v520 = vadd.f32 %v472, %v504
    %v521 = vadd.f32 %v473, %v505
    %v522 = vadd.f32 %v474, %v506
    %v523 = vadd.f32 %v475, %v507
    %v524 = vadd.f32 %v476, %v508
    %v525 = vadd.f32 %v477, %v509
    %v526 = vadd.f32 %v478, %v510
    %v527 = vadd.f32 %v479, %v511
    %v528 = vadd.f32 %v480, %v512
    %v529 = vadd.f32 %v481, %v513
    %v530 = vadd.f32 %v482, %v514
    %v531 = vadd.f32 %v483, %v515
    %v532 = vadd.f32 %v484, %v516
    %v533 = vadd.f32 %v485, %v517
    %v534 = vadd.f32 %v486, %v518
    %v535 = vadd.f32 %v487, %v519
    %v536 = vld [vmem:[#allocation8] sm:$0x1]
    %v538 = vperm.slane %v536, 0
    %v540 = vmul.f32 %v520, %v538
    %v541 = vmul.f32 %v521, %v538
    %v542 = vmul.f32 %v522, %v538
    %v543 = vmul.f32 %v523, %v538
    %v544 = vmul.f32 %v524, %v538
    %v545 = vmul.f32 %v525, %v538
    %v546 = vmul.f32 %v526, %v538
    %v547 = vmul.f32 %v527, %v538
    %v548 = vmul.f32 %v528, %v538
    %v549 = vmul.f32 %v529, %v538
    %v550 = vmul.f32 %v530, %v538
    %v551 = vmul.f32 %v531, %v538
    %v552 = vmul.f32 %v532, %v538
    %v553 = vmul.f32 %v533, %v538
    %v554 = vmul.f32 %v534, %v538
    %v555 = vmul.f32 %v535, %v538
    %v556 = vld [vmem:[#allocation10] sm:$0x1]
    %v558 = vperm.slane %v556, 0
    %v560 = vadd.f32 %v540, %v558
    %v561 = vadd.f32 %v541, %v558
    %v562 = vadd.f32 %v542, %v558
    %v563 = vadd.f32 %v543, %v558
    %v564 = vadd.f32 %v544, %v558
    %v565 = vadd.f32 %v545, %v558
    %v566 = vadd.f32 %v546, %v558
    %v567 = vadd.f32 %v547, %v558
    %v568 = vadd.f32 %v548, %v558
    %v569 = vadd.f32 %v549, %v558
    %v570 = vadd.f32 %v550, %v558
    %v571 = vadd.f32 %v551, %v558
    %v572 = vadd.f32 %v552, %v558
    %v573 = vadd.f32 %v553, %v558
    %v574 = vadd.f32 %v554, %v558
    %v575 = vadd.f32 %v555, %v558
    %v576 = vpack.c.bf16 %v561, %v560
    %v577 = vpack.c.bf16 %v563, %v562
    %v578 = vpack.c.bf16 %v565, %v564
    %v579 = vpack.c.bf16 %v567, %v566
    %v580 = vpack.c.bf16 %v569, %v568
    %v581 = vpack.c.bf16 %v571, %v570
    %v582 = vpack.c.bf16 %v573, %v572
    %v583 = vpack.c.bf16 %v575, %v574
    %v584 = vld [vmem:[#allocation11] sm:$0xf]
    %v585 = vld [vmem:[#allocation11 + $0x4] sm:$0xf]
    %v586 = vld [vmem:[#allocation11 + $0x8] sm:$0xf]
    %v587 = vld [vmem:[#allocation11 + $0xc] sm:$0xf]
    %v588 = vld [vmem:[#allocation11 + $0x10] sm:$0xf]
    %v589 = vld [vmem:[#allocation11 + $0x14] sm:$0xf]
    %v590 = vld [vmem:[#allocation11 + $0x18] sm:$0xf]
    %v591 = vld [vmem:[#allocation11 + $0x1c] sm:$0xf]
    %v592 = vld [vmem:[#allocation11 + $0x20] sm:$0xf]
    %v593 = vld [vmem:[#allocation11 + $0x24] sm:$0xf]
    %v594 = vld [vmem:[#allocation11 + $0x28] sm:$0xf]
    %v595 = vld [vmem:[#allocation11 + $0x2c] sm:$0xf]
    %v596 = vld [vmem:[#allocation11 + $0x30] sm:$0xf]
    %v597 = vld [vmem:[#allocation11 + $0x34] sm:$0xf]
    %v598 = vld [vmem:[#allocation11 + $0x38] sm:$0xf]
    %v599 = vld [vmem:[#allocation11 + $0x3c] sm:$0xf]
    %v600 = vld [vmem:[#allocation13] sm:$0x1]
    %v602 = vperm.slane %v600, 0
    %v620 = vunpack.c.l.b16 %v584
    %v621 = vunpack.c.l.b16 %v585
    %v622 = vunpack.c.l.b16 %v586
    %v623 = vunpack.c.l.b16 %v587
    %v624 = vunpack.c.l.b16 %v588
    %v625 = vunpack.c.l.b16 %v589
    %v626 = vunpack.c.l.b16 %v590
    %v627 = vunpack.c.l.b16 %v591
    %v628 = vunpack.c.l.b16 %v592
    %v629 = vunpack.c.l.b16 %v593
    %v630 = vunpack.c.l.b16 %v594
    %v631 = vunpack.c.l.b16 %v595
    %v632 = vunpack.c.l.b16 %v596
    %v633 = vunpack.c.l.b16 %v597
    %v634 = vunpack.c.l.b16 %v598
    %v635 = vunpack.c.l.b16 %v599
    %v636 = vpack.c.b16 %v621, %v620
    %v637 = vpack.c.b16 %v623, %v622
    %v638 = vpack.c.b16 %v625, %v624
    %v639 = vpack.c.b16 %v627, %v626
    %v640 = vpack.c.b16 %v629, %v628
    %v641 = vpack.c.b16 %v631, %v630
    %v642 = vpack.c.b16 %v633, %v632
    %v643 = vpack.c.b16 %v635, %v634
    %652 = vmatpush.bf16.msra.mxu0 %v643
    %653 = vmatpush.bf16.msra.mxu0 %v642
    %654 = vmatpush.bf16.msra.mxu0 %v641
    %655 = vmatpush.bf16.msra.mxu0 %v640
    %656 = vmatpush.bf16.msra.mxu0 %v639
    %657 = vmatpush.bf16.msra.mxu0 %v638
    %658 = vmatpush.bf16.msra.mxu0 %v637
    %659 = vmatpush.bf16.msra.mxu0 %v636
    %660 = vmatmul.bf16.gmra.mxu0 %v576
    %v661 = vpop.f32.mrf.mxu0
    %v662 = vadd.f32 %v602, %v661
    %v663 = vpop.f32.mrf.mxu0
    %v664 = vadd.f32 %v602, %v663
    %665 = vmatmul.bf16.gmra.mxu0 %v577
    %v666 = vpop.f32.mrf.mxu0
    %v667 = vadd.f32 %v602, %v666
    %v668 = vpop.f32.mrf.mxu0
    %v669 = vadd.f32 %v602, %v668
    %670 = vmatmul.bf16.gmra.mxu0 %v578
    %v671 = vpop.f32.mrf.mxu0
    %v672 = vadd.f32 %v602, %v671
    %v673 = vpop.f32.mrf.mxu0
    %v674 = vadd.f32 %v602, %v673
    %675 = vmatmul.bf16.gmra.mxu0 %v579
    %v676 = vpop.f32.mrf.mxu0
    %v677 = vadd.f32 %v602, %v676
    %v678 = vpop.f32.mrf.mxu0
    %v679 = vadd.f32 %v602, %v678
    %680 = vmatmul.bf16.gmra.mxu0 %v580
    %v681 = vpop.f32.mrf.mxu0
    %v682 = vadd.f32 %v602, %v681
    %v683 = vpop.f32.mrf.mxu0
    %v684 = vadd.f32 %v602, %v683
    %685 = vmatmul.bf16.gmra.mxu0 %v581
    %v686 = vpop.f32.mrf.mxu0
    %v687 = vadd.f32 %v602, %v686
    %v688 = vpop.f32.mrf.mxu0
    %v689 = vadd.f32 %v602, %v688
    %690 = vmatmul.bf16.gmra.mxu0 %v582
    %v691 = vpop.f32.mrf.mxu0
    %v692 = vadd.f32 %v602, %v691
    %v693 = vpop.f32.mrf.mxu0
    %v694 = vadd.f32 %v602, %v693
    %695 = vmatmul.bf16.gmra.mxu0 %v583
    %v696 = vpop.f32.mrf.mxu0
    %v697 = vadd.f32 %v602, %v696
    %v698 = vpop.f32.mrf.mxu0
    %v699 = vadd.f32 %v602, %v698
    %700 = vdwg.mxu0
    %v701 = vmax.f32 %v662, 0.0
    %v702 = vmax.f32 %v664, 0.0
    %v703 = vmax.f32 %v667, 0.0
    %v704 = vmax.f32 %v669, 0.0
    %v705 = vmax.f32 %v672, 0.0
    %v706 = vmax.f32 %v674, 0.0
    %v707 = vmax.f32 %v677, 0.0
    %v708 = vmax.f32 %v679, 0.0
    %v709 = vmax.f32 %v682, 0.0
    %v710 = vmax.f32 %v684, 0.0
    %v711 = vmax.f32 %v687, 0.0
    %v712 = vmax.f32 %v689, 0.0
    %v713 = vmax.f32 %v692, 0.0
    %v714 = vmax.f32 %v694, 0.0
    %v715 = vmax.f32 %v697, 0.0
    %v716 = vmax.f32 %v699, 0.0
    %v717 = vmin.f32 %v662, 0.0
    %v718 = vmin.f32 %v664, 0.0
    %v719 = vmin.f32 %v667, 0.0
    %v720 = vmin.f32 %v669, 0.0
    %v721 = vmin.f32 %v672, 0.0
    %v722 = vmin.f32 %v674, 0.0
    %v723 = vmin.f32 %v677, 0.0
    %v724 = vmin.f32 %v679, 0.0
    %v725 = vmin.f32 %v682, 0.0
    %v726 = vmin.f32 %v684, 0.0
    %v727 = vmin.f32 %v687, 0.0
    %v728 = vmin.f32 %v689, 0.0
    %v729 = vmin.f32 %v692, 0.0
    %v730 = vmin.f32 %v694, 0.0
    %v731 = vmin.f32 %v697, 0.0
    %v732 = vmin.f32 %v699, 0.0
    %v733 = vmul.f32 %v717, 0.2
    %v734 = vmul.f32 %v718, 0.2
    %v735 = vmul.f32 %v719, 0.2
    %v736 = vmul.f32 %v720, 0.2
    %v737 = vmul.f32 %v721, 0.2
    %v738 = vmul.f32 %v722, 0.2
    %v739 = vmul.f32 %v723, 0.2
    %v740 = vmul.f32 %v724, 0.2
    %v741 = vmul.f32 %v725, 0.2
    %v742 = vmul.f32 %v726, 0.2
    %v743 = vmul.f32 %v727, 0.2
    %v744 = vmul.f32 %v728, 0.2
    %v745 = vmul.f32 %v729, 0.2
    %v746 = vmul.f32 %v730, 0.2
    %v747 = vmul.f32 %v731, 0.2
    %v748 = vmul.f32 %v732, 0.2
    %v749 = vadd.f32 %v701, %v733
    %v750 = vadd.f32 %v702, %v734
    %v751 = vadd.f32 %v703, %v735
    %v752 = vadd.f32 %v704, %v736
    %v753 = vadd.f32 %v705, %v737
    %v754 = vadd.f32 %v706, %v738
    %v755 = vadd.f32 %v707, %v739
    %v756 = vadd.f32 %v708, %v740
    %v757 = vadd.f32 %v709, %v741
    %v758 = vadd.f32 %v710, %v742
    %v759 = vadd.f32 %v711, %v743
    %v760 = vadd.f32 %v712, %v744
    %v761 = vadd.f32 %v713, %v745
    %v762 = vadd.f32 %v714, %v746
    %v763 = vadd.f32 %v715, %v747
    %v764 = vadd.f32 %v716, %v748
    %v765 = vpack.c.bf16 %v750, %v749
    %v766 = vpack.c.bf16 %v752, %v751
    %v767 = vpack.c.bf16 %v754, %v753
    %v768 = vpack.c.bf16 %v756, %v755
    %v769 = vpack.c.bf16 %v758, %v757
    %v770 = vpack.c.bf16 %v760, %v759
    %v771 = vpack.c.bf16 %v762, %v761
    %v772 = vpack.c.bf16 %v764, %v763
    %s773 = scalar_lea.vmem [#allocation7], 64
    %v774 = vld [vmem:[%s773] sm:$0xf]
    %v775 = vld [vmem:[%s773 + $0x4] sm:$0xf]
    %v776 = vld [vmem:[%s773 + $0x8] sm:$0xf]
    %v777 = vld [vmem:[%s773 + $0xc] sm:$0xf]
    %v778 = vld [vmem:[%s773 + $0x10] sm:$0xf]
    %v779 = vld [vmem:[%s773 + $0x14] sm:$0xf]
    %v780 = vld [vmem:[%s773 + $0x18] sm:$0xf]
    %v781 = vld [vmem:[%s773 + $0x1c] sm:$0xf]
    %v782 = vld [vmem:[%s773 + $0x20] sm:$0xf]
    %v783 = vld [vmem:[%s773 + $0x24] sm:$0xf]
    %v784 = vld [vmem:[%s773 + $0x28] sm:$0xf]
    %v785 = vld [vmem:[%s773 + $0x2c] sm:$0xf]
    %v786 = vld [vmem:[%s773 + $0x30] sm:$0xf]
    %v787 = vld [vmem:[%s773 + $0x34] sm:$0xf]
    %v788 = vld [vmem:[%s773 + $0x38] sm:$0xf]
    %v789 = vld [vmem:[%s773 + $0x3c] sm:$0xf]
    %v806 = vunpack.c.l.b16 %v774
    %v807 = vunpack.c.l.b16 %v775
    %v808 = vunpack.c.l.b16 %v776
    %v809 = vunpack.c.l.b16 %v777
    %v810 = vunpack.c.l.b16 %v778
    %v811 = vunpack.c.l.b16 %v779
    %v812 = vunpack.c.l.b16 %v780
    %v813 = vunpack.c.l.b16 %v781
    %v814 = vunpack.c.l.b16 %v782
    %v815 = vunpack.c.l.b16 %v783
    %v816 = vunpack.c.l.b16 %v784
    %v817 = vunpack.c.l.b16 %v785
    %v818 = vunpack.c.l.b16 %v786
    %v819 = vunpack.c.l.b16 %v787
    %v820 = vunpack.c.l.b16 %v788
    %v821 = vunpack.c.l.b16 %v789
    %v822 = vpack.c.b16 %v807, %v806
    %v823 = vpack.c.b16 %v809, %v808
    %v824 = vpack.c.b16 %v811, %v810
    %v825 = vpack.c.b16 %v813, %v812
    %v826 = vpack.c.b16 %v815, %v814
    %v827 = vpack.c.b16 %v817, %v816
    %v828 = vpack.c.b16 %v819, %v818
    %v829 = vpack.c.b16 %v821, %v820
    %838 = vmatpush.bf16.msra.mxu0 %v829
    %839 = vmatpush.bf16.msra.mxu0 %v828
    %840 = vmatpush.bf16.msra.mxu0 %v827
    %841 = vmatpush.bf16.msra.mxu0 %v826
    %842 = vmatpush.bf16.msra.mxu0 %v825
    %843 = vmatpush.bf16.msra.mxu0 %v824
    %844 = vmatpush.bf16.msra.mxu0 %v823
    %845 = vmatpush.bf16.msra.mxu0 %v822
    %846 = vmatmul.bf16.gmra.mxu0 %v765
    %v847 = vpop.f32.mrf.mxu0
    %v848 = vadd.f32 0.0, %v847
    %v849 = vpop.f32.mrf.mxu0
    %v850 = vadd.f32 0.0, %v849
    %851 = vmatmul.bf16.gmra.mxu0 %v766
    %v852 = vpop.f32.mrf.mxu0
    %v853 = vadd.f32 0.0, %v852
    %v854 = vpop.f32.mrf.mxu0
    %v855 = vadd.f32 0.0, %v854
    %856 = vmatmul.bf16.gmra.mxu0 %v767
    %v857 = vpop.f32.mrf.mxu0
    %v858 = vadd.f32 0.0, %v857
    %v859 = vpop.f32.mrf.mxu0
    %v860 = vadd.f32 0.0, %v859
    %861 = vmatmul.bf16.gmra.mxu0 %v768
    %v862 = vpop.f32.mrf.mxu0
    %v863 = vadd.f32 0.0, %v862
    %v864 = vpop.f32.mrf.mxu0
    %v865 = vadd.f32 0.0, %v864
    %866 = vmatmul.bf16.gmra.mxu0 %v769
    %v867 = vpop.f32.mrf.mxu0
    %v868 = vadd.f32 0.0, %v867
    %v869 = vpop.f32.mrf.mxu0
    %v870 = vadd.f32 0.0, %v869
    %871 = vmatmul.bf16.gmra.mxu0 %v770
    %v872 = vpop.f32.mrf.mxu0
    %v873 = vadd.f32 0.0, %v872
    %v874 = vpop.f32.mrf.mxu0
    %v875 = vadd.f32 0.0, %v874
    %876 = vmatmul.bf16.gmra.mxu0 %v771
    %v877 = vpop.f32.mrf.mxu0
    %v878 = vadd.f32 0.0, %v877
    %v879 = vpop.f32.mrf.mxu0
    %v880 = vadd.f32 0.0, %v879
    %881 = vmatmul.bf16.gmra.mxu0 %v772
    %v882 = vpop.f32.mrf.mxu0
    %v883 = vadd.f32 0.0, %v882
    %v884 = vpop.f32.mrf.mxu0
    %v885 = vadd.f32 0.0, %v884
    %886 = vdwg.mxu0
    %v887 = vpack.c.bf16 %v850, %v848
    %v888 = vpack.c.bf16 %v855, %v853
    %v889 = vpack.c.bf16 %v860, %v858
    %v890 = vpack.c.bf16 %v865, %v863
    %v891 = vpack.c.bf16 %v870, %v868
    %v892 = vpack.c.bf16 %v875, %v873
    %v893 = vpack.c.bf16 %v880, %v878
    %v894 = vpack.c.bf16 %v885, %v883
    %s895 = scalar_lea.vmem %s3, 1
    %v896 = vld [vmem:[%s895] sm:$0x1]
    %v898 = vperm.slane %v896, 0
    %900 = vmatpush.bf16.msra.mxu0 %v894
    %901 = vmatpush.bf16.msra.mxu0 %v893
    %902 = vmatpush.bf16.msra.mxu0 %v892
    %903 = vmatpush.bf16.msra.mxu0 %v891
    %904 = vmatpush.bf16.msra.mxu0 %v890
    %905 = vmatpush.bf16.msra.mxu0 %v889
    %906 = vmatpush.bf16.msra.mxu0 %v888
    %907 = vmatpush.bf16.msra.mxu0 %v887
    %908 = vmatmul.bf16.gmra.mxu0 %v407
    %v909 = vpop.f32.mrf.mxu0
    %v910 = vadd.f32 %v898, %v909
    %v911 = vpop.f32.mrf.mxu0
    %v912 = vadd.f32 %v898, %v911
    %913 = vmatmul.bf16.gmra.mxu0 %v408
    %v914 = vpop.f32.mrf.mxu0
    %v915 = vadd.f32 %v898, %v914
    %v916 = vpop.f32.mrf.mxu0
    %v917 = vadd.f32 %v898, %v916
    %918 = vmatmul.bf16.gmra.mxu0 %v409
    %v919 = vpop.f32.mrf.mxu0
    %v920 = vadd.f32 %v898, %v919
    %v921 = vpop.f32.mrf.mxu0
    %v922 = vadd.f32 %v898, %v921
    %923 = vmatmul.bf16.gmra.mxu0 %v410
    %v924 = vpop.f32.mrf.mxu0
    %v925 = vadd.f32 %v898, %v924
    %v926 = vpop.f32.mrf.mxu0
    %v927 = vadd.f32 %v898, %v926
    %928 = vmatmul.bf16.gmra.mxu0 %v411
    %v929 = vpop.f32.mrf.mxu0
    %v930 = vadd.f32 %v898, %v929
    %v931 = vpop.f32.mrf.mxu0
    %v932 = vadd.f32 %v898, %v931
    %933 = vmatmul.bf16.gmra.mxu0 %v412
    %v934 = vpop.f32.mrf.mxu0
    %v935 = vadd.f32 %v898, %v934
    %v936 = vpop.f32.mrf.mxu0
    %v937 = vadd.f32 %v898, %v936
    %938 = vmatmul.bf16.gmra.mxu0 %v413
    %v939 = vpop.f32.mrf.mxu0
    %v940 = vadd.f32 %v898, %v939
    %v941 = vpop.f32.mrf.mxu0
    %v942 = vadd.f32 %v898, %v941
    %943 = vmatmul.bf16.gmra.mxu0 %v414
    %v944 = vpop.f32.mrf.mxu0
    %v945 = vadd.f32 %v898, %v944
    %v946 = vpop.f32.mrf.mxu0
    %v947 = vadd.f32 %v898, %v946
    %948 = vdwg.mxu0
    %v949 = vmax.f32 %v910, 0.0
    %v950 = vmax.f32 %v912, 0.0
    %v951 = vmax.f32 %v915, 0.0
    %v952 = vmax.f32 %v917, 0.0
    %v953 = vmax.f32 %v920, 0.0
    %v954 = vmax.f32 %v922, 0.0
    %v955 = vmax.f32 %v925, 0.0
    %v956 = vmax.f32 %v927, 0.0
    %v957 = vmax.f32 %v930, 0.0
    %v958 = vmax.f32 %v932, 0.0
    %v959 = vmax.f32 %v935, 0.0
    %v960 = vmax.f32 %v937, 0.0
    %v961 = vmax.f32 %v940, 0.0
    %v962 = vmax.f32 %v942, 0.0
    %v963 = vmax.f32 %v945, 0.0
    %v964 = vmax.f32 %v947, 0.0
    %v965 = vmin.f32 %v910, 0.0
    %v966 = vmin.f32 %v912, 0.0
    %v967 = vmin.f32 %v915, 0.0
    %v968 = vmin.f32 %v917, 0.0
    %v969 = vmin.f32 %v920, 0.0
    %v970 = vmin.f32 %v922, 0.0
    %v971 = vmin.f32 %v925, 0.0
    %v972 = vmin.f32 %v927, 0.0
    %v973 = vmin.f32 %v930, 0.0
    %v974 = vmin.f32 %v932, 0.0
    %v975 = vmin.f32 %v935, 0.0
    %v976 = vmin.f32 %v937, 0.0
    %v977 = vmin.f32 %v940, 0.0
    %v978 = vmin.f32 %v942, 0.0
    %v979 = vmin.f32 %v945, 0.0
    %v980 = vmin.f32 %v947, 0.0
    %v981 = vmul.f32 %v965, 0.2
    %v982 = vmul.f32 %v966, 0.2
    %v983 = vmul.f32 %v967, 0.2
    %v984 = vmul.f32 %v968, 0.2
    %v985 = vmul.f32 %v969, 0.2
    %v986 = vmul.f32 %v970, 0.2
    %v987 = vmul.f32 %v971, 0.2
    %v988 = vmul.f32 %v972, 0.2
    %v989 = vmul.f32 %v973, 0.2
    %v990 = vmul.f32 %v974, 0.2
    %v991 = vmul.f32 %v975, 0.2
    %v992 = vmul.f32 %v976, 0.2
    %v993 = vmul.f32 %v977, 0.2
    %v994 = vmul.f32 %v978, 0.2
    %v995 = vmul.f32 %v979, 0.2
    %v996 = vmul.f32 %v980, 0.2
    %v997 = vadd.f32 %v949, %v981
    %v998 = vadd.f32 %v950, %v982
    %v999 = vadd.f32 %v951, %v983
    %v1000 = vadd.f32 %v952, %v984
    %v1001 = vadd.f32 %v953, %v985
    %v1002 = vadd.f32 %v954, %v986
    %v1003 = vadd.f32 %v955, %v987
    %v1004 = vadd.f32 %v956, %v988
    %v1005 = vadd.f32 %v957, %v989
    %v1006 = vadd.f32 %v958, %v990
    %v1007 = vadd.f32 %v959, %v991
    %v1008 = vadd.f32 %v960, %v992
    %v1009 = vadd.f32 %v961, %v993
    %v1010 = vadd.f32 %v962, %v994
    %v1011 = vadd.f32 %v963, %v995
    %v1012 = vadd.f32 %v964, %v996
    %s1013 = scalar_lea.vmem [#allocation8], 1
    %v1014 = vld [vmem:[%s1013] sm:$0x1]
    %v1016 = vperm.slane %v1014, 0
    %v1018 = vmul.f32 %v997, %v1016
    %v1019 = vmul.f32 %v998, %v1016
    %v1020 = vmul.f32 %v999, %v1016
    %v1021 = vmul.f32 %v1000, %v1016
    %v1022 = vmul.f32 %v1001, %v1016
    %v1023 = vmul.f32 %v1002, %v1016
    %v1024 = vmul.f32 %v1003, %v1016
    %v1025 = vmul.f32 %v1004, %v1016
    %v1026 = vmul.f32 %v1005, %v1016
    %v1027 = vmul.f32 %v1006, %v1016
    %v1028 = vmul.f32 %v1007, %v1016
    %v1029 = vmul.f32 %v1008, %v1016
    %v1030 = vmul.f32 %v1009, %v1016
    %v1031 = vmul.f32 %v1010, %v1016
    %v1032 = vmul.f32 %v1011, %v1016
    %v1033 = vmul.f32 %v1012, %v1016
    %s1034 = scalar_lea.vmem [#allocation10], 1
    %v1035 = vld [vmem:[%s1034] sm:$0x1]
    %v1037 = vperm.slane %v1035, 0
    %v1039 = vadd.f32 %v1018, %v1037
    %v1040 = vadd.f32 %v1019, %v1037
    %v1041 = vadd.f32 %v1020, %v1037
    %v1042 = vadd.f32 %v1021, %v1037
    %v1043 = vadd.f32 %v1022, %v1037
    %v1044 = vadd.f32 %v1023, %v1037
    %v1045 = vadd.f32 %v1024, %v1037
    %v1046 = vadd.f32 %v1025, %v1037
    %v1047 = vadd.f32 %v1026, %v1037
    %v1048 = vadd.f32 %v1027, %v1037
    %v1049 = vadd.f32 %v1028, %v1037
    %v1050 = vadd.f32 %v1029, %v1037
    %v1051 = vadd.f32 %v1030, %v1037
    %v1052 = vadd.f32 %v1031, %v1037
    %v1053 = vadd.f32 %v1032, %v1037
    %v1054 = vadd.f32 %v1033, %v1037
    %v1055 = vpack.c.bf16 %v1040, %v1039
    %v1056 = vpack.c.bf16 %v1042, %v1041
    %v1057 = vpack.c.bf16 %v1044, %v1043
    %v1058 = vpack.c.bf16 %v1046, %v1045
    %v1059 = vpack.c.bf16 %v1048, %v1047
    %v1060 = vpack.c.bf16 %v1050, %v1049
    %v1061 = vpack.c.bf16 %v1052, %v1051
    %v1062 = vpack.c.bf16 %v1054, %v1053
    %s1063 = scalar_lea.vmem [#allocation11], 64
    %v1064 = vld [vmem:[%s1063] sm:$0xf]
    %v1065 = vld [vmem:[%s1063 + $0x4] sm:$0xf]
    %v1066 = vld [vmem:[%s1063 + $0x8] sm:$0xf]
    %v1067 = vld [vmem:[%s1063 + $0xc] sm:$0xf]
    %v1068 = vld [vmem:[%s1063 + $0x10] sm:$0xf]
    %v1069 = vld [vmem:[%s1063 + $0x14] sm:$0xf]
    %v1070 = vld [vmem:[%s1063 + $0x18] sm:$0xf]
    %v1071 = vld [vmem:[%s1063 + $0x1c] sm:$0xf]
    %v1072 = vld [vmem:[%s1063 + $0x20] sm:$0xf]
    %v1073 = vld [vmem:[%s1063 + $0x24] sm:$0xf]
    %v1074 = vld [vmem:[%s1063 + $0x28] sm:$0xf]
    %v1075 = vld [vmem:[%s1063 + $0x2c] sm:$0xf]
    %v1076 = vld [vmem:[%s1063 + $0x30] sm:$0xf]
    %v1077 = vld [vmem:[%s1063 + $0x34] sm:$0xf]
    %v1078 = vld [vmem:[%s1063 + $0x38] sm:$0xf]
    %v1079 = vld [vmem:[%s1063 + $0x3c] sm:$0xf]
    %s1080 = scalar_lea.vmem [#allocation13], 1
    %v1081 = vld [vmem:[%s1080] sm:$0x1]
    %v1083 = vperm.slane %v1081, 0
    %v1101 = vunpack.c.l.b16 %v1064
    %v1102 = vunpack.c.l.b16 %v1065
    %v1103 = vunpack.c.l.b16 %v1066
    %v1104 = vunpack.c.l.b16 %v1067
    %v1105 = vunpack.c.l.b16 %v1068
    %v1106 = vunpack.c.l.b16 %v1069
    %v1107 = vunpack.c.l.b16 %v1070
    %v1108 = vunpack.c.l.b16 %v1071
    %v1109 = vunpack.c.l.b16 %v1072
    %v1110 = vunpack.c.l.b16 %v1073
    %v1111 = vunpack.c.l.b16 %v1074
    %v1112 = vunpack.c.l.b16 %v1075
    %v1113 = vunpack.c.l.b16 %v1076
    %v1114 = vunpack.c.l.b16 %v1077
    %v1115 = vunpack.c.l.b16 %v1078
    %v1116 = vunpack.c.l.b16 %v1079
    %v1117 = vpack.c.b16 %v1102, %v1101
    %v1118 = vpack.c.b16 %v1104, %v1103
    %v1119 = vpack.c.b16 %v1106, %v1105
    %v1120 = vpack.c.b16 %v1108, %v1107
    %v1121 = vpack.c.b16 %v1110, %v1109
    %v1122 = vpack.c.b16 %v1112, %v1111
    %v1123 = vpack.c.b16 %v1114, %v1113
    %v1124 = vpack.c.b16 %v1116, %v1115
    %1133 = vmatpush.bf16.msra.mxu0 %v1124
    %1134 = vmatpush.bf16.msra.mxu0 %v1123
    %1135 = vmatpush.bf16.msra.mxu0 %v1122
    %1136 = vmatpush.bf16.msra.mxu0 %v1121
    %1137 = vmatpush.bf16.msra.mxu0 %v1120
    %1138 = vmatpush.bf16.msra.mxu0 %v1119
    %1139 = vmatpush.bf16.msra.mxu0 %v1118
    %1140 = vmatpush.bf16.msra.mxu0 %v1117
    %1141 = vmatmul.bf16.gmra.mxu0 %v1055
    %v1142 = vpop.f32.mrf.mxu0
    %v1143 = vadd.f32 %v1083, %v1142
    %v1144 = vpop.f32.mrf.mxu0
    %v1145 = vadd.f32 %v1083, %v1144
    %1146 = vmatmul.bf16.gmra.mxu0 %v1056
    %v1147 = vpop.f32.mrf.mxu0
    %v1148 = vadd.f32 %v1083, %v1147
    %v1149 = vpop.f32.mrf.mxu0
    %v1150 = vadd.f32 %v1083, %v1149
    %1151 = vmatmul.bf16.gmra.mxu0 %v1057
    %v1152 = vpop.f32.mrf.mxu0
    %v1153 = vadd.f32 %v1083, %v1152
    %v1154 = vpop.f32.mrf.mxu0
    %v1155 = vadd.f32 %v1083, %v1154
    %1156 = vmatmul.bf16.gmra.mxu0 %v1058
    %v1157 = vpop.f32.mrf.mxu0
    %v1158 = vadd.f32 %v1083, %v1157
    %v1159 = vpop.f32.mrf.mxu0
    %v1160 = vadd.f32 %v1083, %v1159
    %1161 = vmatmul.bf16.gmra.mxu0 %v1059
    %v1162 = vpop.f32.mrf.mxu0
    %v1163 = vadd.f32 %v1083, %v1162
    %v1164 = vpop.f32.mrf.mxu0
    %v1165 = vadd.f32 %v1083, %v1164
    %1166 = vmatmul.bf16.gmra.mxu0 %v1060
    %v1167 = vpop.f32.mrf.mxu0
    %v1168 = vadd.f32 %v1083, %v1167
    %v1169 = vpop.f32.mrf.mxu0
    %v1170 = vadd.f32 %v1083, %v1169
    %1171 = vmatmul.bf16.gmra.mxu0 %v1061
    %v1172 = vpop.f32.mrf.mxu0
    %v1173 = vadd.f32 %v1083, %v1172
    %v1174 = vpop.f32.mrf.mxu0
    %v1175 = vadd.f32 %v1083, %v1174
    %1176 = vmatmul.bf16.gmra.mxu0 %v1062
    %v1177 = vpop.f32.mrf.mxu0
    %v1178 = vadd.f32 %v1083, %v1177
    %v1179 = vpop.f32.mrf.mxu0
    %v1180 = vadd.f32 %v1083, %v1179
    %1181 = vdwg.mxu0
    %v1182 = vmax.f32 %v1143, 0.0
    %v1183 = vmax.f32 %v1145, 0.0
    %v1184 = vmax.f32 %v1148, 0.0
    %v1185 = vmax.f32 %v1150, 0.0
    %v1186 = vmax.f32 %v1153, 0.0
    %v1187 = vmax.f32 %v1155, 0.0
    %v1188 = vmax.f32 %v1158, 0.0
    %v1189 = vmax.f32 %v1160, 0.0
    %v1190 = vmax.f32 %v1163, 0.0
    %v1191 = vmax.f32 %v1165, 0.0
    %v1192 = vmax.f32 %v1168, 0.0
    %v1193 = vmax.f32 %v1170, 0.0
    %v1194 = vmax.f32 %v1173, 0.0
    %v1195 = vmax.f32 %v1175, 0.0
    %v1196 = vmax.f32 %v1178, 0.0
    %v1197 = vmax.f32 %v1180, 0.0
    %v1198 = vmin.f32 %v1143, 0.0
    %v1199 = vmin.f32 %v1145, 0.0
    %v1200 = vmin.f32 %v1148, 0.0
    %v1201 = vmin.f32 %v1150, 0.0
    %v1202 = vmin.f32 %v1153, 0.0
    %v1203 = vmin.f32 %v1155, 0.0
    %v1204 = vmin.f32 %v1158, 0.0
    %v1205 = vmin.f32 %v1160, 0.0
    %v1206 = vmin.f32 %v1163, 0.0
    %v1207 = vmin.f32 %v1165, 0.0
    %v1208 = vmin.f32 %v1168, 0.0
    %v1209 = vmin.f32 %v1170, 0.0
    %v1210 = vmin.f32 %v1173, 0.0
    %v1211 = vmin.f32 %v1175, 0.0
    %v1212 = vmin.f32 %v1178, 0.0
    %v1213 = vmin.f32 %v1180, 0.0
    %v1214 = vmul.f32 %v1198, 0.2
    %v1215 = vmul.f32 %v1199, 0.2
    %v1216 = vmul.f32 %v1200, 0.2
    %v1217 = vmul.f32 %v1201, 0.2
    %v1218 = vmul.f32 %v1202, 0.2
    %v1219 = vmul.f32 %v1203, 0.2
    %v1220 = vmul.f32 %v1204, 0.2
    %v1221 = vmul.f32 %v1205, 0.2
    %v1222 = vmul.f32 %v1206, 0.2
    %v1223 = vmul.f32 %v1207, 0.2
    %v1224 = vmul.f32 %v1208, 0.2
    %v1225 = vmul.f32 %v1209, 0.2
    %v1226 = vmul.f32 %v1210, 0.2
    %v1227 = vmul.f32 %v1211, 0.2
    %v1228 = vmul.f32 %v1212, 0.2
    %v1229 = vmul.f32 %v1213, 0.2
    %v1230 = vadd.f32 %v1182, %v1214
    %v1231 = vadd.f32 %v1183, %v1215
    %v1232 = vadd.f32 %v1184, %v1216
    %v1233 = vadd.f32 %v1185, %v1217
    %v1234 = vadd.f32 %v1186, %v1218
    %v1235 = vadd.f32 %v1187, %v1219
    %v1236 = vadd.f32 %v1188, %v1220
    %v1237 = vadd.f32 %v1189, %v1221
    %v1238 = vadd.f32 %v1190, %v1222
    %v1239 = vadd.f32 %v1191, %v1223
    %v1240 = vadd.f32 %v1192, %v1224
    %v1241 = vadd.f32 %v1193, %v1225
    %v1242 = vadd.f32 %v1194, %v1226
    %v1243 = vadd.f32 %v1195, %v1227
    %v1244 = vadd.f32 %v1196, %v1228
    %v1245 = vadd.f32 %v1197, %v1229
    %v1246 = vpack.c.bf16 %v1231, %v1230
    %v1247 = vpack.c.bf16 %v1233, %v1232
    %v1248 = vpack.c.bf16 %v1235, %v1234
    %v1249 = vpack.c.bf16 %v1237, %v1236
    %v1250 = vpack.c.bf16 %v1239, %v1238
    %v1251 = vpack.c.bf16 %v1241, %v1240
    %v1252 = vpack.c.bf16 %v1243, %v1242
    %v1253 = vpack.c.bf16 %v1245, %v1244
    %v1254 = vld [vmem:[%s8] sm:$0xf]
    %1255 = vmatpush.bf16.msra.mxu0 %v1253
    %1256 = vmatpush.bf16.msra.mxu0 %v1252
    %1257 = vmatpush.bf16.msra.mxu0 %v1251
    %1258 = vmatpush.bf16.msra.mxu0 %v1250
    %1259 = vmatpush.bf16.msra.mxu0 %v1249
    %1260 = vmatpush.bf16.msra.mxu0 %v1248
    %1261 = vmatpush.bf16.msra.mxu0 %v1247
    %1262 = vmatpush.bf16.msra.mxu0 %v1246
    %1263 = vmatmul.bf16.gmra.mxu0 %v1254
    %v1264 = vpop.f32.mrf.mxu0
    %v1265 = vadd.f32 0.0, %v1264
    %v1266 = vpop.f32.mrf.mxu0
    %1267 = vdwg.mxu0
    %v1268 = vld [vmem:[%s9] sm:$0x1]
    %v1270 = vperm.slane %v1268, 0
    %v1272 = vmul.f32 %v1265, %v1270
    %v1273 = vld [vmem:[%s10] sm:$0x1]
    %v1275 = vperm.slane %v1273, 0
    %v1277 = vadd.f32 %v1272, %v1275
    %v1278 = vpack.c.bf16 %v1277, %v1277
    %v1279 = vld [vmem:[#allocation14] sm:$0xf]
    %v1280 = vld [vmem:[#allocation14 + $0x4] sm:$0xf]
    %v1281 = vld [vmem:[#allocation14 + $0x8] sm:$0xf]
    %v1282 = vld [vmem:[#allocation14 + $0xc] sm:$0xf]
    %v1283 = vld [vmem:[#allocation14 + $0x10] sm:$0xf]
    %v1284 = vld [vmem:[#allocation14 + $0x14] sm:$0xf]
    %v1285 = vld [vmem:[#allocation14 + $0x18] sm:$0xf]
    %v1286 = vld [vmem:[#allocation14 + $0x1c] sm:$0xf]
    %v1287 = vld [vmem:[#allocation14 + $0x20] sm:$0xf]
    %v1288 = vld [vmem:[#allocation14 + $0x24] sm:$0xf]
    %v1289 = vld [vmem:[#allocation14 + $0x28] sm:$0xf]
    %v1290 = vld [vmem:[#allocation14 + $0x2c] sm:$0xf]
    %v1291 = vld [vmem:[#allocation14 + $0x30] sm:$0xf]
    %v1292 = vld [vmem:[#allocation14 + $0x34] sm:$0xf]
    %v1293 = vld [vmem:[#allocation14 + $0x38] sm:$0xf]
    %v1294 = vld [vmem:[#allocation14 + $0x3c] sm:$0xf]
    %v1295 = vld [vmem:[%s12] sm:$0x1]
    %v1297 = vperm.slane %v1295, 0
    %v1315 = vunpack.c.l.b16 %v1279
    %v1316 = vunpack.c.l.b16 %v1280
    %v1317 = vunpack.c.l.b16 %v1281
    %v1318 = vunpack.c.l.b16 %v1282
    %v1319 = vunpack.c.l.b16 %v1283
    %v1320 = vunpack.c.l.b16 %v1284
    %v1321 = vunpack.c.l.b16 %v1285
    %v1322 = vunpack.c.l.b16 %v1286
    %v1323 = vunpack.c.l.b16 %v1287
    %v1324 = vunpack.c.l.b16 %v1288
    %v1325 = vunpack.c.l.b16 %v1289
    %v1326 = vunpack.c.l.b16 %v1290
    %v1327 = vunpack.c.l.b16 %v1291
    %v1328 = vunpack.c.l.b16 %v1292
    %v1329 = vunpack.c.l.b16 %v1293
    %v1330 = vunpack.c.l.b16 %v1294
    %v1331 = vpack.c.b16 %v1316, %v1315
    %v1332 = vpack.c.b16 %v1318, %v1317
    %v1333 = vpack.c.b16 %v1320, %v1319
    %v1334 = vpack.c.b16 %v1322, %v1321
    %v1335 = vpack.c.b16 %v1324, %v1323
    %v1336 = vpack.c.b16 %v1326, %v1325
    %v1337 = vpack.c.b16 %v1328, %v1327
    %v1338 = vpack.c.b16 %v1330, %v1329
    %1347 = vmatpush.bf16.msra.mxu0 %v1338
    %1348 = vmatpush.bf16.msra.mxu0 %v1337
    %1349 = vmatpush.bf16.msra.mxu0 %v1336
    %1350 = vmatpush.bf16.msra.mxu0 %v1335
    %1351 = vmatpush.bf16.msra.mxu0 %v1334
    %1352 = vmatpush.bf16.msra.mxu0 %v1333
    %1353 = vmatpush.bf16.msra.mxu0 %v1332
    %1354 = vmatpush.bf16.msra.mxu0 %v1331
    %1355 = vmatmul.bf16.gmra.mxu0 %v1278
    %v1356 = vpop.f32.mrf.mxu0
    %v1357 = vadd.f32 %v1297, %v1356
    %v1358 = vpop.f32.mrf.mxu0
    %1359 = vdwg.mxu0
    %1360 = vst [vmem:[#allocation16] sm:$0xff] %v1357
    // Predicated region
    $region86: #{tpu_custom_call.1} parent=1 // pred_check
      _
    $region87: #{tpu_custom_call.1} parent=1 // pred_check_branch
      %1362 = sbr.rel (0) target = $region89
    $region88: #{tpu_custom_call.1} parent=1 // pred_region
      %1364 = vsyncadd [#allocation4], 0
      %s1366 = sshll.u32 [#allocation16], 4
      %s1367 = int_to_ptr.vmem [resolvable:$true] %s1366
      %s1368 = sshll.u32 %s13, 4
      %s1369 = int_to_ptr.hbm [resolvable:$true] %s1368
      %1371 = dma.vmem_to_hbm [thread:$0]  %s1367, 128, %s1369, [#allocation4]
    $region89: #{tpu_custom_call.1} parent=1 // pred_fallthru
      _
    // Predicated region
    $region90: #{tpu_custom_call.1} parent=1 // pred_check
      _
    $region91: #{tpu_custom_call.1} parent=1 // pred_check_branch
      %1373 = sbr.rel (0) target = $region93
    $region92: #{tpu_custom_call.1} parent=1 // pred_region
      %1375 = dma.done [#allocation4], 128
    $region93: #{tpu_custom_call.1} parent=1 // pred_fallthru
      _
    %1376 = vsyncpa [#allocation3], 1
    %1377 = vsyncpa [#allocation6], 1
    %1378 = vsyncpa [#allocation9], 1
    %1379 = vsyncpa [#allocation12], 1
    %1380 = vsyncpa [#allocation15], 1
    %1381 = vsyncpa [#allocation4], 1

</llo_original>
